<compile_context>
chip_gen: v7x
topology: tpu7x:2x2x1
jax: 0.10.0
libtpu: 0.0.40
codegen_flags: <defaults>
</compile_context>

<pallas_src>
import functools

import jax
import jax.numpy as jnp
import numpy as np
from jax.experimental import pallas as pl
from jax.experimental.pallas import tpu as pltpu

# ----------------------------- model config -----------------------------
OUTPUT_DIM = 64     # vocab size V
EMB_DIM    = 32
HIDDEN_DIM = 32
N_LAYERS   = 2
BATCH      = 8
DTYPE      = jnp.float32
SLAB_W     = 128                            # lane width of weight slab / padded logits
STATE_W    = 2 * N_LAYERS * HIDDEN_DIM      # packed state width: h0|c0|h1|c1

assert 4 * HIDDEN_DIM == SLAB_W, "gate width must fill the 128-lane slab"
assert OUTPUT_DIM <= SLAB_W
assert STATE_W == 128, "packed state must be one full 128-lane vreg row"


# ----------------------- packed weight-slab layout -----------------------
def _build_slab_offsets():
    off, r = {}, 0
    off["t0"] = r;  r += OUTPUT_DIM          # emb @ W_ih0^T (permuted)   [V , 4H]
    off["wh0"] = r; r += HIDDEN_DIM          # W_hh0^T (permuted)         [H , 4H]
    for l in range(1, N_LAYERS):
        off[f"wx{l}"] = r; r += HIDDEN_DIM   # W_ih_l^T (permuted)        [H , 4H]
        off[f"wh{l}"] = r; r += HIDDEN_DIM   # W_hh_l^T (permuted)        [H , 4H]
    off["wfc"] = r; r += HIDDEN_DIM          # fc_out.weight^T, 0-padded  [H , 128]
    for l in range(N_LAYERS):
        off[f"b{l}"] = r; r += 1             # b_ih_l + b_hh_l (permuted) [1 , 4H]
    off["bfc"] = r; r += 1                   # fc_out.bias, 0-padded      [1 , 128]
    off["_rows"] = r
    return off


OFF = _build_slab_offsets()
SLAB_ROWS = ((OFF["_rows"] + 7) // 8) * 8    # sublane-pad (195 -> 200 rows)

# True-f32 MXU matmul (multi-pass), f32 accumulate.
_dot = functools.partial(jnp.dot, preferred_element_type=jnp.float32,
                         precision=jax.lax.Precision.HIGHEST)


# ----------------------------- fused Pallas kernel -----------------------------
def _decoder_kernel(tok_ref, state_in_ref, w_ref, logits_ref, state_out_ref, state_scr):
    """One decode step; executed for each t of grid=(T,).

    tok_ref       [1, B, 1]        int32 token ids for this step (per-step block)
    state_in_ref  [B, 2*L*H]       initial packed state (h0|c0|h1|c1); read at t==0
    w_ref         [SLAB_ROWS, 128] packed weight slab (constant block -> fetched once)
    logits_ref    [1, B, 128]      padded logits for this step (per-step block)
    state_out_ref [B, 2*L*H]       final packed state (HBM-aliased with state_in)
    state_scr     [B, 2*L*H]       VMEM scratch carrying the state across steps
    """
    t = pl.program_id(0)
    H = HIDDEN_DIM
    V = OUTPUT_DIM
    B = tok_ref.shape[1]

    @pl.when(t == 0)
    def _():
        state_scr[...] = state_in_ref[...]

    state = state_scr[...]                                         # [B, 2*L*H]

    # Token ids -> one-hot.  (Out-of-range ids map to a zero embedding row;
    # PyTorch would error instead — callers must keep ids in [0, V).)
    tok = tok_ref[0]                                               # [B, 1] int32
    vocab_ids = jax.lax.broadcasted_iota(jnp.int32, (B, V), 1)     # [B, V]
    onehot = (vocab_ids == tok).astype(jnp.float32)                # [B, V]

    x = None
    new_parts = []
    for l in range(N_LAYERS):
        h_prev = state[:, (2 * l) * H:(2 * l + 1) * H]             # [B, H]
        c_prev = state[:, (2 * l + 1) * H:(2 * l + 2) * H]         # [B, H]
        if l == 0:
            # Embedding folded into the layer-0 input projection (pure associativity).
            gates = (_dot(onehot, w_ref[OFF["t0"]:OFF["t0"] + V, :])
                     + _dot(h_prev, w_ref[OFF["wh0"]:OFF["wh0"] + H, :]))
        else:
            gates = (_dot(x, w_ref[OFF[f"wx{l}"]:OFF[f"wx{l}"] + H, :])
                     + _dot(h_prev, w_ref[OFF[f"wh{l}"]:OFF[f"wh{l}"] + H, :]))
        gates = gates + w_ref[OFF[f"b{l}"]:OFF[f"b{l}"] + 1, :]     # [B, 4H]
        # Gate columns pre-permuted to (i, f, o, g): one sigmoid slab + one tanh slab.
        sig = jax.nn.sigmoid(gates[:, :3 * H])
        g_g = jnp.tanh(gates[:, 3 * H:])
        i_g, f_g, o_g = sig[:, :H], sig[:, H:2 * H], sig[:, 2 * H:3 * H]
        c_new = f_g * c_prev + i_g * g_g
        h_new = o_g * jnp.tanh(c_new)
        new_parts += [h_new, c_new]
        x = h_new        # inter-layer dropout is identity in eval mode

    new_state = jnp.concatenate(new_parts, axis=-1)                # [B, 2*L*H] lane-dense
    state_scr[...] = new_state

    # fc_out on 128-lane padded weights -> unmasked full-lane logits store.
    logits = (_dot(x, w_ref[OFF["wfc"]:OFF["wfc"] + H, :])
              + w_ref[OFF["bfc"]:OFF["bfc"] + 1, :])
    logits_ref[0] = logits.astype(logits_ref.dtype)

    @pl.when(t == pl.num_programs(0) - 1)
    def _():
        state_out_ref[...] = new_state.astype(state_out_ref.dtype)


# ----------------------------- pallas_call wrapper -----------------------------
def _run_decoder(slab, tokens_tb, state):
    """tokens_tb [T, B] int32, state [B, 2*L*H] f32 -> (logits [T, B, V], state_out)."""
    T, B = tokens_tb.shape
    tok3d = tokens_tb.reshape(T, B, 1).astype(jnp.int32)
    logits_pad, state_out = pl.pallas_call(
        _decoder_kernel,
        out_shape=(
            jax.ShapeDtypeStruct((T, B, SLAB_W), DTYPE),
            jax.ShapeDtypeStruct((B, STATE_W), DTYPE),
        ),
        grid_spec=pltpu.PrefetchScalarGridSpec(
            num_scalar_prefetch=0,
            grid=(T,),
            in_specs=[
                pl.BlockSpec((1, B, 1), lambda t: (t, 0, 0)),          # tokens: per step
                pl.BlockSpec((B, STATE_W), lambda t: (0, 0)),          # state: fetched once
                pl.BlockSpec((SLAB_ROWS, SLAB_W), lambda t: (0, 0)),   # weights: fetched once
            ],
            out_specs=(
                pl.BlockSpec((1, B, SLAB_W), lambda t: (t, 0, 0)),     # logits: per step
                pl.BlockSpec((B, STATE_W), lambda t: (0, 0)),          # final state
            ),
            scratch_shapes=[pltpu.VMEM((B, STATE_W), jnp.float32)],    # state carry
        ),
        # Packed state updated in place at HBM level; the aliased operand is a
        # wrapper intermediate with one consumer, so no defensive copy is inserted.
        input_output_aliases={1: 1},
        compiler_params=pltpu.CompilerParams(
            dimension_semantics=("arbitrary",)),   # sequential recurrence; no core split
    )(tok3d, state, slab)
    return logits_pad[..., :OUTPUT_DIM], state_out


def _pack_state(hidden, cell):
    parts = []
    for l in range(N_LAYERS):
        parts += [hidden[l], cell[l]]
    return jnp.concatenate(parts, axis=-1)                          # [B, 2*L*H]


def _unpack_state(state):
    H = HIDDEN_DIM
    h = jnp.stack([state[:, (2 * l) * H:(2 * l + 1) * H] for l in range(N_LAYERS)], axis=0)
    c = jnp.stack([state[:, (2 * l + 1) * H:(2 * l + 2) * H] for l in range(N_LAYERS)], axis=0)
    return h, c


@jax.jit
def decoder_lstm_forward(params, tokens, hidden, cell):
    """Single decode step — matches DecoderLSTM.forward:
       tokens [B] int32, hidden/cell [N_LAYERS, B, H] -> (prediction [B, V], hidden, cell)."""
    state = _pack_state(hidden, cell)
    logits, state_out = _run_decoder(params["slab"], tokens.reshape(1, -1), state)
    h, c = _unpack_state(state_out)
    return logits[0], h, c


@jax.jit
def decoder_lstm_decode(params, tokens_tb, hidden, cell):
    """T teacher-forced decode steps fused into ONE pallas_call (grid=(T,)):
       tokens_tb [T, B] int32 -> (predictions [T, B, V], hidden, cell)."""
    state = _pack_state(hidden, cell)
    logits, state_out = _run_decoder(params["slab"], tokens_tb, state)
    h, c = _unpack_state(state_out)
    return logits, h, c


# ----------------------------- parameter init -----------------------------
def init_params(key):
    """Returns (raw PyTorch-layout params, fused params {'slab': [SLAB_ROWS, 128] f32})."""
    H, E, V = HIDDEN_DIM, EMB_DIM, OUTPUT_DIM
    ks = jax.random.split(key, 3 + 4 * N_LAYERS)
    emb  = jax.random.normal(ks[0], (V, E), DTYPE) * 0.1
    w_fc = jax.random.normal(ks[1], (V, H), DTYPE) * 0.1
    b_fc = jax.random.normal(ks[2], (V,), DTYPE) * 0.1

    raw = {"embedding": emb, "w_ih": [], "w_hh": [], "b_ih": [], "b_hh": [],
           "w_fc": w_fc, "b_fc": b_fc}

    # Offline gate-column permutation: PyTorch (i, f, g, o) -> kernel (i, f, o, g).
    perm = np.concatenate([np.arange(0, H), np.arange(H, 2 * H),
                           np.arange(3 * H, 4 * H), np.arange(2 * H, 3 * H)])

    slab = np.zeros((SLAB_ROWS, SLAB_W), np.float64)
    for l in range(N_LAYERS):
        in_dim = E if l == 0 else H
        k0, k1, k2, k3 = ks[3 + 4 * l: 7 + 4 * l]
        # PyTorch layout: weight_ih_l{l} [4H, in_dim], weight_hh_l{l} [4H, H].
        w_ih = jax.random.normal(k0, (4 * H, in_dim), DTYPE) * 0.1
        w_hh = jax.random.normal(k1, (4 * H, H), DTYPE) * 0.1
        b_ih = jax.random.normal(k2, (4 * H,), DTYPE) * 0.1
        b_hh = jax.random.normal(k3, (4 * H,), DTYPE) * 0.1
        raw["w_ih"].append(w_ih); raw["w_hh"].append(w_hh)
        raw["b_ih"].append(b_ih); raw["b_hh"].append(b_hh)

        w_ih_np = np.asarray(w_ih, np.float64)
        w_hh_np = np.asarray(w_hh, np.float64)
        if l == 0:
            # Fold embedding into layer 0: T0 = emb @ W_ih0^T, columns permuted.
            t0 = np.asarray(emb, np.float64) @ w_ih_np.T                 # [V, 4H]
            slab[OFF["t0"]:OFF["t0"] + V, :4 * H] = t0[:, perm]
        else:
            slab[OFF[f"wx{l}"]:OFF[f"wx{l}"] + H, :4 * H] = w_ih_np.T[:, perm]
        slab[OFF[f"wh{l}"]:OFF[f"wh{l}"] + H, :4 * H] = w_hh_np.T[:, perm]
        slab[OFF[f"b{l}"], :4 * H] = (np.asarray(b_ih, np.float64)
                                      + np.asarray(b_hh, np.float64))[perm]

    slab[OFF["wfc"]:OFF["wfc"] + H, :V] = np.asarray(w_fc, np.float64).T
    slab[OFF["bfc"], :V] = np.asarray(b_fc, np.float64)

    fused = {"slab": jnp.asarray(slab, DTYPE)}
    return raw, fused


# ----------------------------- plain-JAX reference -----------------------------
def reference_step(raw, tokens, hidden, cell):
    """Direct transcription of the PyTorch module (gate order i, f, g, o)."""
    H = HIDDEN_DIM
    hp = functools.partial(jnp.dot, precision=jax.lax.Precision.HIGHEST)
    x = jnp.take(raw["embedding"], tokens, axis=0)                 # [B, E]
    new_h, new_c = [], []
    for l in range(N_LAYERS):
        gates = (hp(x, raw["w_ih"][l].T) + hp(hidden[l], raw["w_hh"][l].T)
                 + raw["b_ih"][l] + raw["b_hh"][l])
        i_g = jax.nn.sigmoid(gates[:, 0 * H:1 * H])
        f_g = jax.nn.sigmoid(gates[:, 1 * H:2 * H])
        g_g = jnp.tanh(gates[:, 2 * H:3 * H])
        o_g = jax.nn.sigmoid(gates[:, 3 * H:4 * H])
        c_new = f_g * cell[l] + i_g * g_g
        h_new = o_g * jnp.tanh(c_new)
        new_h.append(h_new); new_c.append(c_new)
        x = h_new
    pred = hp(x, raw["w_fc"].T) + raw["b_fc"]
    return pred, jnp.stack(new_h, axis=0), jnp.stack(new_c, axis=0)


def reference_decode(raw, tokens_tb, hidden, cell):
    preds, h, c = [], hidden, cell
    for t in range(tokens_tb.shape[0]):
        p, h, c = reference_step(raw, tokens_tb[t], h, c)
        preds.append(p)
    return jnp.stack(preds, axis=0), h, c


# ----------------------------- demo -----------------------------
if __name__ == "__main__":
    key = jax.random.PRNGKey(0)
    k_param, k_tok, k_h, k_c = jax.random.split(key, 4)

    raw, fused = init_params(k_param)

    SEQ_LEN = 8
    tokens_tb = jax.random.randint(k_tok, (SEQ_LEN, BATCH), 0, OUTPUT_DIM, dtype=jnp.int32)
    hidden = jax.random.normal(k_h, (N_LAYERS, BATCH, HIDDEN_DIM), DTYPE)
    cell   = jax.random.normal(k_c, (N_LAYERS, BATCH, HIDDEN_DIM), DTYPE)

    # --- single step: exactly DecoderLSTM.forward semantics (T = 1) ---
    pred, h1, c1 = decoder_lstm_forward(fused, tokens_tb[0], hidden, cell)
    jax.block_until_ready((pred, h1, c1))
    assert pred.shape == (BATCH, OUTPUT_DIM)
    assert h1.shape == (N_LAYERS, BATCH, HIDDEN_DIM)
    assert c1.shape == (N_LAYERS, BATCH, HIDDEN_DIM)

    pred_r, h1_r, c1_r = jax.jit(reference_step)(raw, tokens_tb[0], hidden, cell)
    np.testing.assert_allclose(np.asarray(pred), np.asarray(pred_r), rtol=1e-4, atol=1e-4)
    np.testing.assert_allclose(np.asarray(h1), np.asarray(h1_r), rtol=1e-4, atol=1e-4)
    np.testing.assert_allclose(np.asarray(c1), np.asarray(c1_r), rtol=1e-4, atol=1e-4)

    # --- SEQ_LEN teacher-forced steps fused into one kernel launch (grid=(T,)) ---
    logits, hT, cT = decoder_lstm_decode(fused, tokens_tb, hidden, cell)
    jax.block_until_ready((logits, hT, cT))
    assert logits.shape == (SEQ_LEN, BATCH, OUTPUT_DIM)

    logits_r, hT_r, cT_r = jax.jit(reference_decode)(raw, tokens_tb, hidden, cell)
    np.testing.assert_allclose(np.asarray(logits), np.asarray(logits_r), rtol=2e-4, atol=2e-4)
    np.testing.assert_allclose(np.asarray(hT), np.asarray(hT_r), rtol=2e-4, atol=2e-4)
    np.testing.assert_allclose(np.asarray(cT), np.asarray(cT_r), rtol=2e-4, atol=2e-4)

    print("KERNEL_OK")
</pallas_src>

<mosaic_0001>
module attributes {stable_mosaic.version = 11 : i64} {
  func.func @_decoder_kernel(%arg0: i32, %arg1: memref<1x8x1xi32, #tpu.memory_space<vmem>>, %arg2: memref<8x128xf32, #tpu.memory_space<vmem>>, %arg3: memref<200x128xf32, #tpu.memory_space<vmem>>, %arg4: memref<1x8x128xf32, #tpu.memory_space<vmem>>, %arg5: memref<8x128xf32, #tpu.memory_space<vmem>>, %arg6: memref<8x128xf32, #tpu.memory_space<vmem>>) attributes {dimension_semantics = [#tpu.dimension_semantics<arbitrary>], iteration_bounds = array<i64: 1>, scalar_prefetch = 0 : i64, scratch_operands = 1 : i64, tpu.core_type = #tpu.core_type<tc>, window_params = [{transform_indices = @transform_0, window_bounds = array<i64: 1, 8, 1>}, {pipeline_mode = #tpu.pipeline_mode<synchronous>, transform_indices = @transform_1, window_bounds = array<i64: 8, 128>}, {pipeline_mode = #tpu.pipeline_mode<synchronous>, transform_indices = @transform_2, window_bounds = array<i64: 200, 128>}, {transform_indices = @transform_3, window_bounds = array<i64: 1, 8, 128>}, {pipeline_mode = #tpu.pipeline_mode<synchronous>, transform_indices = @transform_4, window_bounds = array<i64: 8, 128>}]} {
    %c0_i32 = arith.constant 0 : i32
    %0 = arith.cmpi eq, %arg0, %c0_i32 : i32
    %1 = arith.extui %0 : i1 to i32
    %c0_i32_0 = arith.constant 0 : i32
    %2 = arith.cmpi ne, %1, %c0_i32_0 : i32
    scf.if %2 {
      %c0_27 = arith.constant 0 : index
      %c0_28 = arith.constant 0 : index
      %76 = vector.load %arg2[%c0_27, %c0_28] : memref<8x128xf32, #tpu.memory_space<vmem>>, vector<8x128xf32>
      %c0_29 = arith.constant 0 : index
      %c0_30 = arith.constant 0 : index
      %77 = vector.load %arg6[%c0_29, %c0_30] : memref<8x128xf32, #tpu.memory_space<vmem>>, vector<8x128xf32>
      tpu.vector_store %arg6[%c0_29, %c0_30], %76 {strides = array<i32>} : memref<8x128xf32, #tpu.memory_space<vmem>>, vector<8x128xf32>,
    } else {
    }
    %c0 = arith.constant 0 : index
    %c0_1 = arith.constant 0 : index
    %3 = vector.load %arg6[%c0, %c0_1] : memref<8x128xf32, #tpu.memory_space<vmem>>, vector<8x128xf32>
    %c0_2 = arith.constant 0 : index
    %c0_3 = arith.constant 0 : index
    %c0_4 = arith.constant 0 : index
    %4 = vector.load %arg1[%c0_2, %c0_3, %c0_4] : memref<1x8x1xi32, #tpu.memory_space<vmem>>, vector<1x8x1xi32>
    %5 = vector.shape_cast %4 : vector<1x8x1xi32> to vector<8x1xi32>
    %6 = tpu.iota {dimensions = array<i32: 1>} : vector<8x64xi32>
    %7 = vector.broadcast %5 : vector<8x1xi32> to vector<8x64xi32>
    %8 = arith.cmpi eq, %6, %7 : vector<8x64xi32>
    %9 = arith.extui %8 : vector<8x64xi1> to vector<8x64xi32>
    %10 = arith.sitofp %9 : vector<8x64xi32> to vector<8x64xf32>
    %11 = vector.extract_strided_slice %3 {offsets = [0, 0], sizes = [8, 32], strides = [1, 1]} : vector<8x128xf32> to vector<8x32xf32>
    %12 = vector.extract_strided_slice %3 {offsets = [0, 32], sizes = [8, 32], strides = [1, 1]} : vector<8x128xf32> to vector<8x32xf32>
    %c0_5 = arith.constant 0 : index
    %c0_6 = arith.constant 0 : index
    %13 = vector.load %arg3[%c0_5, %c0_6] : memref<200x128xf32, #tpu.memory_space<vmem>>, vector<64x128xf32>
    %cst = arith.constant dense<0.000000e+00> : vector<8x128xf32>
    %14 = tpu.matmul %10, %13, %cst {dimension_numbers = #tpu.dot_dimension_numbers<[1], [0], [0], [1], [0, 0, 1, 1], [], []>, precision = #tpu.contract_precision<fp32>} : vector<8x64xf32>, vector<64x128xf32>, vector<8x128xf32> -> vector<8x128xf32>
    %c64 = arith.constant 64 : index
    %c0_7 = arith.constant 0 : index
    %15 = vector.load %arg3[%c64, %c0_7] : memref<200x128xf32, #tpu.memory_space<vmem>>, vector<32x128xf32>
    %cst_8 = arith.constant dense<0.000000e+00> : vector<8x128xf32>
    %16 = tpu.matmul %11, %15, %cst_8 {dimension_numbers = #tpu.dot_dimension_numbers<[1], [0], [0], [1], [0, 0, 1, 1], [], []>, precision = #tpu.contract_precision<fp32>} : vector<8x32xf32>, vector<32x128xf32>, vector<8x128xf32> -> vector<8x128xf32>
    %17 = arith.addf %14, %16 : vector<8x128xf32>
    %c192 = arith.constant 192 : index
    %c0_9 = arith.constant 0 : index
    %18 = vector.load %arg3[%c192, %c0_9] : memref<200x128xf32, #tpu.memory_space<vmem>>, vector<1x128xf32>
    %19 = vector.broadcast %18 : vector<1x128xf32> to vector<8x128xf32>
    %20 = arith.addf %17, %19 : vector<8x128xf32>
    %21 = vector.extract_strided_slice %20 {offsets = [0, 0], sizes = [8, 96], strides = [1, 1]} : vector<8x128xf32> to vector<8x96xf32>
    %22 = arith.negf %21 : vector<8x96xf32>
    %23 = math.exp %22 : vector<8x96xf32>
    %cst_10 = arith.constant 1.000000e+00 : f32
    %24 = vector.broadcast %cst_10 : f32 to vector<8x96xf32>
    %25 = arith.addf %24, %23 : vector<8x96xf32>
    %26 = arith.divf %24, %25 : vector<8x96xf32>
    %27 = vector.extract_strided_slice %20 {offsets = [0, 96], sizes = [8, 32], strides = [1, 1]} : vector<8x128xf32> to vector<8x32xf32>
    %28 = math.tanh %27 : vector<8x32xf32>
    %29 = vector.extract_strided_slice %26 {offsets = [0, 0], sizes = [8, 32], strides = [1, 1]} : vector<8x96xf32> to vector<8x32xf32>
    %30 = vector.extract_strided_slice %26 {offsets = [0, 32], sizes = [8, 32], strides = [1, 1]} : vector<8x96xf32> to vector<8x32xf32>
    %31 = vector.extract_strided_slice %26 {offsets = [0, 64], sizes = [8, 32], strides = [1, 1]} : vector<8x96xf32> to vector<8x32xf32>
    %32 = arith.mulf %30, %12 : vector<8x32xf32>
    %33 = arith.mulf %29, %28 : vector<8x32xf32>
    %34 = arith.addf %32, %33 : vector<8x32xf32>
    %35 = math.tanh %34 : vector<8x32xf32>
    %36 = arith.mulf %31, %35 : vector<8x32xf32>
    %37 = vector.extract_strided_slice %3 {offsets = [0, 64], sizes = [8, 32], strides = [1, 1]} : vector<8x128xf32> to vector<8x32xf32>
    %38 = vector.extract_strided_slice %3 {offsets = [0, 96], sizes = [8, 32], strides = [1, 1]} : vector<8x128xf32> to vector<8x32xf32>
    %c96 = arith.constant 96 : index
    %c0_11 = arith.constant 0 : index
    %39 = vector.load %arg3[%c96, %c0_11] : memref<200x128xf32, #tpu.memory_space<vmem>>, vector<32x128xf32>
    %cst_12 = arith.constant dense<0.000000e+00> : vector<8x128xf32>
    %40 = tpu.matmul %36, %39, %cst_12 {dimension_numbers = #tpu.dot_dimension_numbers<[1], [0], [0], [1], [0, 0, 1, 1], [], []>, precision = #tpu.contract_precision<fp32>} : vector<8x32xf32>, vector<32x128xf32>, vector<8x128xf32> -> vector<8x128xf32>
    %c128 = arith.constant 128 : index
    %c0_13 = arith.constant 0 : index
    %41 = vector.load %arg3[%c128, %c0_13] : memref<200x128xf32, #tpu.memory_space<vmem>>, vector<32x128xf32>
    %cst_14 = arith.constant dense<0.000000e+00> : vector<8x128xf32>
    %42 = tpu.matmul %37, %41, %cst_14 {dimension_numbers = #tpu.dot_dimension_numbers<[1], [0], [0], [1], [0, 0, 1, 1], [], []>, precision = #tpu.contract_precision<fp32>} : vector<8x32xf32>, vector<32x128xf32>, vector<8x128xf32> -> vector<8x128xf32>
    %43 = arith.addf %40, %42 : vector<8x128xf32>
    %c193 = arith.constant 193 : index
    %c0_15 = arith.constant 0 : index
    %44 = vector.load %arg3[%c193, %c0_15] : memref<200x128xf32, #tpu.memory_space<vmem>>, vector<1x128xf32>
    %45 = vector.broadcast %44 : vector<1x128xf32> to vector<8x128xf32>
    %46 = arith.addf %43, %45 : vector<8x128xf32>
    %47 = vector.extract_strided_slice %46 {offsets = [0, 0], sizes = [8, 96], strides = [1, 1]} : vector<8x128xf32> to vector<8x96xf32>
    %48 = arith.negf %47 : vector<8x96xf32>
    %49 = math.exp %48 : vector<8x96xf32>
    %cst_16 = arith.constant 1.000000e+00 : f32
    %50 = vector.broadcast %cst_16 : f32 to vector<8x96xf32>
    %51 = arith.addf %50, %49 : vector<8x96xf32>
    %52 = arith.divf %50, %51 : vector<8x96xf32>
    %53 = vector.extract_strided_slice %46 {offsets = [0, 96], sizes = [8, 32], strides = [1, 1]} : vector<8x128xf32> to vector<8x32xf32>
    %54 = math.tanh %53 : vector<8x32xf32>
    %55 = vector.extract_strided_slice %52 {offsets = [0, 0], sizes = [8, 32], strides = [1, 1]} : vector<8x96xf32> to vector<8x32xf32>
    %56 = vector.extract_strided_slice %52 {offsets = [0, 32], sizes = [8, 32], strides = [1, 1]} : vector<8x96xf32> to vector<8x32xf32>
    %57 = vector.extract_strided_slice %52 {offsets = [0, 64], sizes = [8, 32], strides = [1, 1]} : vector<8x96xf32> to vector<8x32xf32>
    %58 = arith.mulf %56, %38 : vector<8x32xf32>
    %59 = arith.mulf %55, %54 : vector<8x32xf32>
    %60 = arith.addf %58, %59 : vector<8x32xf32>
    %61 = math.tanh %60 : vector<8x32xf32>
    %62 = arith.mulf %57, %61 : vector<8x32xf32>
    %63 = tpu.concatenate %36, %34, %62, %60 in 1 : vector<8x32xf32>, vector<8x32xf32>, vector<8x32xf32>, vector<8x32xf32> -> vector<8x128xf32>
    %c0_17 = arith.constant 0 : index
    %c0_18 = arith.constant 0 : index
    %64 = vector.load %arg6[%c0_17, %c0_18] : memref<8x128xf32, #tpu.memory_space<vmem>>, vector<8x128xf32>
    tpu.vector_store %arg6[%c0_17, %c0_18], %63 {strides = array<i32>} : memref<8x128xf32, #tpu.memory_space<vmem>>, vector<8x128xf32>,
    %c160 = arith.constant 160 : index
    %c0_19 = arith.constant 0 : index
    %65 = vector.load %arg3[%c160, %c0_19] : memref<200x128xf32, #tpu.memory_space<vmem>>, vector<32x128xf32>
    %cst_20 = arith.constant dense<0.000000e+00> : vector<8x128xf32>
    %66 = tpu.matmul %62, %65, %cst_20 {dimension_numbers = #tpu.dot_dimension_numbers<[1], [0], [0], [1], [0, 0, 1, 1], [], []>, precision = #tpu.contract_precision<fp32>} : vector<8x32xf32>, vector<32x128xf32>, vector<8x128xf32> -> vector<8x128xf32>
    %c194 = arith.constant 194 : index
    %c0_21 = arith.constant 0 : index
    %67 = vector.load %arg3[%c194, %c0_21] : memref<200x128xf32, #tpu.memory_space<vmem>>, vector<1x128xf32>
    %68 = vector.broadcast %67 : vector<1x128xf32> to vector<8x128xf32>
    %69 = arith.addf %66, %68 : vector<8x128xf32>
    %c0_22 = arith.constant 0 : index
    %c0_23 = arith.constant 0 : index
    %c0_24 = arith.constant 0 : index
    %70 = vector.load %arg4[%c0_22, %c0_23, %c0_24] : memref<1x8x128xf32, #tpu.memory_space<vmem>>, vector<1x8x128xf32>
    %71 = vector.shape_cast %70 : vector<1x8x128xf32> to vector<8x128xf32>
    %72 = vector.shape_cast %69 : vector<8x128xf32> to vector<1x8x128xf32>
    tpu.vector_store %arg4[%c0_22, %c0_23, %c0_24], %72 {strides = array<i32>} : memref<1x8x128xf32, #tpu.memory_space<vmem>>, vector<1x8x128xf32>,
    %c0_i32_25 = arith.constant 0 : i32
    %73 = arith.cmpi eq, %arg0, %c0_i32_25 : i32
    %74 = arith.extui %73 : i1 to i32
    %c0_i32_26 = arith.constant 0 : i32
    %75 = arith.cmpi ne, %74, %c0_i32_26 : i32
    scf.if %75 {
      %c0_27 = arith.constant 0 : index
      %c0_28 = arith.constant 0 : index
      %76 = vector.load %arg5[%c0_27, %c0_28] : memref<8x128xf32, #tpu.memory_space<vmem>>, vector<8x128xf32>
      tpu.vector_store %arg5[%c0_27, %c0_28], %63 {strides = array<i32>} : memref<8x128xf32, #tpu.memory_space<vmem>>, vector<8x128xf32>,
    } else {
    }
    return
  }
  func.func @transform_0(%arg0: i32) -> (i32, i32, i32) {
    %c0_i32 = arith.constant 0 : i32
    %c0_i32_0 = arith.constant 0 : i32
    %c0_i32_1 = arith.constant 0 : i32
    return %arg0, %c0_i32, %c0_i32_0 : i32, i32, i32
  }
  func.func @transform_1(%arg0: i32) -> (i32, i32) {
    %c0_i32 = arith.constant 0 : i32
    %c0_i32_0 = arith.constant 0 : i32
    %c0_i32_1 = arith.constant 0 : i32
    return %c0_i32, %c0_i32_0 : i32, i32
  }
  func.func @transform_2(%arg0: i32) -> (i32, i32) {
    %c0_i32 = arith.constant 0 : i32
    %c0_i32_0 = arith.constant 0 : i32
    %c0_i32_1 = arith.constant 0 : i32
    return %c0_i32, %c0_i32_0 : i32, i32
  }
  func.func @transform_3(%arg0: i32) -> (i32, i32, i32) {
    %c0_i32 = arith.constant 0 : i32
    %c0_i32_0 = arith.constant 0 : i32
    %c0_i32_1 = arith.constant 0 : i32
    return %arg0, %c0_i32, %c0_i32_0 : i32, i32, i32
  }
  func.func @transform_4(%arg0: i32) -> (i32, i32) {
    %c0_i32 = arith.constant 0 : i32
    %c0_i32_0 = arith.constant 0 : i32
    %c0_i32_1 = arith.constant 0 : i32
    return %c0_i32, %c0_i32_0 : i32, i32
  }
}

</mosaic_0001>

<llo_original>
// kernel: decoder_lstm_forward.1
$region0: #{decoder_lstm_forward.1}
  #allocation0 [shape = 'u32[]', space=smem, size = 0x4, offset = 0x4, fixed_abs, tag = 'smem constant byte address 0x4 - core index']
  #allocation1 [shape = 'u32[144,128]{1,0:T(1,128)}', space=vmem, size = 0x12000, scoped, tag = 'internal scratch']
  #allocation2 [shape = 'f32[8,128]{1,0:T(8,128)}', space=vmem, size = 0x1000, scoped, tag = 'scratch operand']
  %s0 = inlined_call_operand.vmem [shape: s32[1,8,1], index: 0, kind: input, shape index: {}]
  %s1 = inlined_call_operand.vmem [shape: f32[8,128], index: 1, kind: input, shape index: {}, may-alias: {1,4}]
  %s2 = inlined_call_operand.hbm [shape: f32[200,128], index: 2, kind: input, shape index: {}]
  %s3 = inlined_call_operand.vmem [shape: f32[1,8,128], index: 3, kind: output, shape index: {0}]
  %s4 = inlined_call_operand.vmem [shape: f32[8,128], index: 4, kind: output, shape index: {1}, may-alias: {1,4}]
  %5 = xla_tuple %s3, %s4
  %s6 = sld [smem:[#allocation0]]
  $region42: #{decoder_lstm_forward.1} parent=0
    _
  %s8 = ssub.s32 1, %s6
  %s9 = scalar_select 0, %s8, %s6
  $region1: #{decoder_lstm_forward.1} parent=0
    #allocation3 [shape = 'u8[102400]{0}', space=vmem, size = 0x19000, scoped, tag = 'input window, operand 2, single buffered']
    #allocation4 [shape = 's32[1]{0}', space=sflag, size = 0x4, scoped, tag = 'scoped memory for decoder_lstm_forward.1']
    %10 = vsyncpa [#allocation4], 0
    // Predicated region
    $region2: #{decoder_lstm_forward.1} parent=1 // pred_check
      _
    $region3: #{decoder_lstm_forward.1} parent=1 // pred_check_branch
      %12 = sbr.rel (0) target = $region5
    $region4: #{decoder_lstm_forward.1} parent=1 // pred_region
      _
    $region5: #{decoder_lstm_forward.1} parent=1 // pred_fallthru
      _
    // Predicated region
    $region6: #{decoder_lstm_forward.1} parent=1 // pred_check
      _
    $region7: #{decoder_lstm_forward.1} parent=1 // pred_check_branch
      %14 = sbr.rel (0) target = $region9
    $region8: #{decoder_lstm_forward.1} parent=1 // pred_region
      _
    $region9: #{decoder_lstm_forward.1} parent=1 // pred_fallthru
      _
    // Predicated region
    $region10: #{decoder_lstm_forward.1} parent=1 // pred_check
      _
    $region11: #{decoder_lstm_forward.1} parent=1 // pred_check_branch
      %16 = sbr.rel (0) target = $region13
    $region12: #{decoder_lstm_forward.1} parent=1 // pred_region
      %s18 = ssub.s32 3200, 3200
      %19 = vsyncadd [#allocation4], %s18
      %s20 = sshll.u32 [#allocation3], 4
      %s21 = int_to_ptr.vmem [resolvable:$true] %s20
      %26 = dma.hbm_to_vmem [thread:$0]  %s2, 3200, %s21, [#allocation4], 128, 128, 8
    $region13: #{decoder_lstm_forward.1} parent=1 // pred_fallthru
      _
    // Predicated region
    $region14: #{decoder_lstm_forward.1} parent=1 // pred_check
      _
    $region15: #{decoder_lstm_forward.1} parent=1 // pred_check_branch
      %28 = sbr.rel (0) target = $region17
    $region16: #{decoder_lstm_forward.1} parent=1 // pred_region
      %29 = dma.done [#allocation4], 3200
    $region17: #{decoder_lstm_forward.1} parent=1 // pred_fallthru
      _
    %p30 = scmp.eq.s32.totalorder 0, 0
    // Predicated region
    $region18: #{decoder_lstm_forward.1} parent=1 // pred_check
      %p31 = pneg %p30
    $region19: #{decoder_lstm_forward.1} parent=1 // pred_check_branch
      %33 = sbr.rel (%p31) target = $region21
    $region20: #{decoder_lstm_forward.1} parent=1 // pred_region
      %v34 = vld [vmem:[%s1] sm:$0xff]
      %35 = vst [vmem:[#allocation2] sm:$0xff] %v34
    $region21: #{decoder_lstm_forward.1} parent=1 // pred_fallthru
      _
    %v36 = vld [vmem:[#allocation2] sm:$0xff]
    %v37 = vld [vmem:[%s0] sm:$0xff]
    %v38 = vlaneseq
    %v39 = vand.u32 %v38, 127
    %40 = vset.pattern.permute.xlu0 0
    %41 = vperm.xlu0 %40, %v37
    %v42 = vpop.permute.xlu0 %41
    %vm43 = vcmp.eq.s32.totalorder %v39, %v42
    %v44 = vsel %vm43, 1, 0
    %v45 = vcvt.s32.f32 %v44
    %v46 = vld [vmem:[#allocation3] sm:$0xff]
    %v47 = vld [vmem:[#allocation3 + $0x8] sm:$0xff]
    %v48 = vld [vmem:[#allocation3 + $0x10] sm:$0xff]
    %v49 = vld [vmem:[#allocation3 + $0x18] sm:$0xff]
    %v50 = vld [vmem:[#allocation3 + $0x20] sm:$0xff]
    %v51 = vld [vmem:[#allocation3 + $0x28] sm:$0xff]
    %v52 = vld [vmem:[#allocation3 + $0x30] sm:$0xff]
    %v53 = vld [vmem:[#allocation3 + $0x38] sm:$0xff]
    %v54 = vld [vmem:[#allocation3 + $0x40] sm:$0xff]
    %v55 = vld [vmem:[#allocation3 + $0x48] sm:$0xff]
    %v56 = vld [vmem:[#allocation3 + $0x50] sm:$0xff]
    %v57 = vld [vmem:[#allocation3 + $0x58] sm:$0xff]
    %vm58 = vcmask 261120
    %v60 = vsel %vm58, %v36, 0
    %62 = vmatprep.subr.mxu0 0.0
    %v63 = vand.u32 %v54, 4294901760
    %64 = vmatpush1.msra.mxu0 %v63
    %65 = vmatprep.subr.mxu0 0.0
    %v66 = vand.u32 %v55, 4294901760
    %67 = vmatpush1.msra.mxu0 %v66
    %68 = vmatprep.subr.mxu0 0.0
    %v69 = vand.u32 %v56, 4294901760
    %70 = vmatpush1.msra.mxu0 %v69
    %71 = vmatprep.subr.mxu0 0.0
    %v72 = vand.u32 %v57, 4294901760
    %73 = vmatpush1.msra.mxu0 %v72
    %74 = vmatprep.subr.mxu0 0.0
    %75 = vmatpush1.msra.mxu0 0.0
    %76 = vmatprep.subr.mxu0 0.0
    %77 = vmatpush1.msra.mxu0 0.0
    %78 = vmatprep.subr.mxu0 0.0
    %79 = vmatpush1.msra.mxu0 0.0
    %80 = vmatprep.subr.mxu0 0.0
    %81 = vmatpush1.msra.mxu0 0.0
    %82 = vmatprep.subr.mxu0 0.0
    %83 = vmatpush1.msra.mxu0 0.0
    %84 = vmatprep.subr.mxu0 0.0
    %85 = vmatpush1.msra.mxu0 0.0
    %86 = vmatprep.subr.mxu0 0.0
    %87 = vmatpush1.msra.mxu0 0.0
    %88 = vmatprep.subr.mxu0 0.0
    %89 = vmatpush1.msra.mxu0 0.0
    %90 = vmatprep.subr.mxu0 0.0
    %91 = vmatpush1.msra.mxu0 0.0
    %92 = vmatprep.subr.mxu0 0.0
    %93 = vmatpush1.msra.mxu0 0.0
    %94 = vmatprep.subr.mxu0 0.0
    %95 = vmatpush1.msra.mxu0 0.0
    %96 = vmatprep.subr.mxu0 0.0
    %97 = vmatpush1.msra.mxu0 0.0
    %98 = vmatprep.subr.mxu0 0.0
    %99 = vmatpush1.msra.mxu0 0.0
    %100 = vmatprep.subr.mxu0 0.0
    %101 = vmatpush1.msra.mxu0 0.0
    %102 = vmatprep.subr.mxu0 0.0
    %103 = vmatpush1.msra.mxu0 0.0
    %104 = vmatprep.subr.mxu0 0.0
    %105 = vmatpush1.msra.mxu0 0.0
    %106 = vmatprep.subr.mxu0 0.0
    %107 = vmatpush1.msra.mxu0 0.0
    %108 = vmatprep.subr.mxu0 0.0
    %109 = vmatpush1.msra.mxu0 0.0
    %110 = vmatprep.subr.mxu0 0.0
    %111 = vmatpush1.msra.mxu0 0.0
    %112 = vmatprep.subr.mxu0 0.0
    %113 = vmatpush1.msra.mxu0 0.0
    %114 = vmatprep.subr.mxu0 0.0
    %115 = vmatpush1.msra.mxu0 0.0
    %116 = vmatprep.subr.mxu0 0.0
    %117 = vmatpush1.msra.mxu0 0.0
    %118 = vmatprep.subr.mxu0 0.0
    %119 = vmatpush1.msra.mxu0 0.0
    %120 = vmatprep.subr.mxu0 0.0
    %121 = vmatpush1.msra.mxu0 0.0
    %122 = vmatprep.subr.mxu0 0.0
    %123 = vmatpush1.msra.mxu0 0.0
    %124 = vmatprep.subr.mxu0 0.0
    %125 = vmatpush1.msra.mxu0 0.0
    %126 = vmatprep.subr.mxu0 0.0
    %127 = vmatpush1.msra.mxu0 0.0
    %128 = vmatprep.subr.mxu0 0.0
    %129 = vmatpush1.msra.mxu0 0.0
    %130 = vmatprep.mubr.f32.mxu0 0.0
    %v131 = vand.u32 %v60, 4294901760
    %v132 = vsub.f32 %v60, %v131
    %v133 = vand.u32 %v132, 4294901760
    %v134 = vsub.f32 %v132, %v133
    %v135 = vand.u32 %v134, 4294901760
    %136 = vmatmul.mubr.f32.gmra.mrb[0].mxu0 %v135
    %v137 = vpop.f32.mrb[0].mxu0
    %v138 = vadd.f32 0.0, %v137
    %v139 = vpop.f32.mrb[0].mxu0
    %140 = vdwg.mxu0
    %141 = vmatprep.subr.mxu0 0.0
    %v142 = vand.u32 %v54, 4294901760
    %v143 = vsub.f32 %v54, %v142
    %v144 = vand.u32 %v143, 4294901760
    %v145 = vsub.f32 %v143, %v144
    %v146 = vand.u32 %v145, 4294901760
    %147 = vmatpush1.msra.mxu0 %v146
    %148 = vmatprep.subr.mxu0 0.0
    %v149 = vand.u32 %v55, 4294901760
    %v150 = vsub.f32 %v55, %v149
    %v151 = vand.u32 %v150, 4294901760
    %v152 = vsub.f32 %v150, %v151
    %v153 = vand.u32 %v152, 4294901760
    %154 = vmatpush1.msra.mxu0 %v153
    %155 = vmatprep.subr.mxu0 0.0
    %v156 = vand.u32 %v56, 4294901760
    %v157 = vsub.f32 %v56, %v156
    %v158 = vand.u32 %v157, 4294901760
    %v159 = vsub.f32 %v157, %v158
    %v160 = vand.u32 %v159, 4294901760
    %161 = vmatpush1.msra.mxu0 %v160
    %162 = vmatprep.subr.mxu0 0.0
    %v163 = vand.u32 %v57, 4294901760
    %v164 = vsub.f32 %v57, %v163
    %v165 = vand.u32 %v164, 4294901760
    %v166 = vsub.f32 %v164, %v165
    %v167 = vand.u32 %v166, 4294901760
    %168 = vmatpush1.msra.mxu0 %v167
    %169 = vmatprep.subr.mxu0 0.0
    %170 = vmatpush1.msra.mxu0 0.0
    %171 = vmatprep.subr.mxu0 0.0
    %172 = vmatpush1.msra.mxu0 0.0
    %173 = vmatprep.subr.mxu0 0.0
    %174 = vmatpush1.msra.mxu0 0.0
    %175 = vmatprep.subr.mxu0 0.0
    %176 = vmatpush1.msra.mxu0 0.0
    %177 = vmatprep.subr.mxu0 0.0
    %178 = vmatpush1.msra.mxu0 0.0
    %179 = vmatprep.subr.mxu0 0.0
    %180 = vmatpush1.msra.mxu0 0.0
    %181 = vmatprep.subr.mxu0 0.0
    %182 = vmatpush1.msra.mxu0 0.0
    %183 = vmatprep.subr.mxu0 0.0
    %184 = vmatpush1.msra.mxu0 0.0
    %185 = vmatprep.subr.mxu0 0.0
    %186 = vmatpush1.msra.mxu0 0.0
    %187 = vmatprep.subr.mxu0 0.0
    %188 = vmatpush1.msra.mxu0 0.0
    %189 = vmatprep.subr.mxu0 0.0
    %190 = vmatpush1.msra.mxu0 0.0
    %191 = vmatprep.subr.mxu0 0.0
    %192 = vmatpush1.msra.mxu0 0.0
    %193 = vmatprep.subr.mxu0 0.0
    %194 = vmatpush1.msra.mxu0 0.0
    %195 = vmatprep.subr.mxu0 0.0
    %196 = vmatpush1.msra.mxu0 0.0
    %197 = vmatprep.subr.mxu0 0.0
    %198 = vmatpush1.msra.mxu0 0.0
    %199 = vmatprep.subr.mxu0 0.0
    %200 = vmatpush1.msra.mxu0 0.0
    %201 = vmatprep.subr.mxu0 0.0
    %202 = vmatpush1.msra.mxu0 0.0
    %203 = vmatprep.subr.mxu0 0.0
    %204 = vmatpush1.msra.mxu0 0.0
    %205 = vmatprep.subr.mxu0 0.0
    %206 = vmatpush1.msra.mxu0 0.0
    %207 = vmatprep.subr.mxu0 0.0
    %208 = vmatpush1.msra.mxu0 0.0
    %209 = vmatprep.subr.mxu0 0.0
    %210 = vmatpush1.msra.mxu0 0.0
    %211 = vmatprep.subr.mxu0 0.0
    %212 = vmatpush1.msra.mxu0 0.0
    %213 = vmatprep.subr.mxu0 0.0
    %214 = vmatpush1.msra.mxu0 0.0
    %215 = vmatprep.subr.mxu0 0.0
    %216 = vmatpush1.msra.mxu0 0.0
    %217 = vmatprep.subr.mxu0 0.0
    %218 = vmatpush1.msra.mxu0 0.0
    %219 = vmatprep.subr.mxu0 0.0
    %220 = vmatpush1.msra.mxu0 0.0
    %221 = vmatprep.subr.mxu0 0.0
    %222 = vmatpush1.msra.mxu0 0.0
    %223 = vmatprep.subr.mxu0 0.0
    %224 = vmatpush1.msra.mxu0 0.0
    %225 = vmatprep.mubr.f32.mxu0 0.0
    %v226 = vand.u32 %v60, 4294901760
    %227 = vmatmul.mubr.f32.gmra.mrb[0].mxu0 %v226
    %v228 = vpop.f32.mrb[0].mxu0
    %v229 = vadd.f32 %v138, %v228
    %v230 = vpop.f32.mrb[0].mxu0
    %231 = vdwg.mxu0
    %232 = vmatprep.subr.mxu0 0.0
    %v233 = vand.u32 %v54, 4294901760
    %v234 = vsub.f32 %v54, %v233
    %235 = vmatpush1.msra.mxu0 %v234
    %236 = vmatprep.subr.mxu0 0.0
    %v237 = vand.u32 %v55, 4294901760
    %v238 = vsub.f32 %v55, %v237
    %239 = vmatpush1.msra.mxu0 %v238
    %240 = vmatprep.subr.mxu0 0.0
    %v241 = vand.u32 %v56, 4294901760
    %v242 = vsub.f32 %v56, %v241
    %243 = vmatpush1.msra.mxu0 %v242
    %244 = vmatprep.subr.mxu0 0.0
    %v245 = vand.u32 %v57, 4294901760
    %v246 = vsub.f32 %v57, %v245
    %247 = vmatpush1.msra.mxu0 %v246
    %248 = vmatprep.subr.mxu0 0.0
    %249 = vmatpush1.msra.mxu0 0.0
    %250 = vmatprep.subr.mxu0 0.0
    %251 = vmatpush1.msra.mxu0 0.0
    %252 = vmatprep.subr.mxu0 0.0
    %253 = vmatpush1.msra.mxu0 0.0
    %254 = vmatprep.subr.mxu0 0.0
    %255 = vmatpush1.msra.mxu0 0.0
    %256 = vmatprep.subr.mxu0 0.0
    %257 = vmatpush1.msra.mxu0 0.0
    %258 = vmatprep.subr.mxu0 0.0
    %259 = vmatpush1.msra.mxu0 0.0
    %260 = vmatprep.subr.mxu0 0.0
    %261 = vmatpush1.msra.mxu0 0.0
    %262 = vmatprep.subr.mxu0 0.0
    %263 = vmatpush1.msra.mxu0 0.0
    %264 = vmatprep.subr.mxu0 0.0
    %265 = vmatpush1.msra.mxu0 0.0
    %266 = vmatprep.subr.mxu0 0.0
    %267 = vmatpush1.msra.mxu0 0.0
    %268 = vmatprep.subr.mxu0 0.0
    %269 = vmatpush1.msra.mxu0 0.0
    %270 = vmatprep.subr.mxu0 0.0
    %271 = vmatpush1.msra.mxu0 0.0
    %272 = vmatprep.subr.mxu0 0.0
    %273 = vmatpush1.msra.mxu0 0.0
    %274 = vmatprep.subr.mxu0 0.0
    %275 = vmatpush1.msra.mxu0 0.0
    %276 = vmatprep.subr.mxu0 0.0
    %277 = vmatpush1.msra.mxu0 0.0
    %278 = vmatprep.subr.mxu0 0.0
    %279 = vmatpush1.msra.mxu0 0.0
    %280 = vmatprep.subr.mxu0 0.0
    %281 = vmatpush1.msra.mxu0 0.0
    %282 = vmatprep.subr.mxu0 0.0
    %283 = vmatpush1.msra.mxu0 0.0
    %284 = vmatprep.subr.mxu0 0.0
    %285 = vmatpush1.msra.mxu0 0.0
    %286 = vmatprep.subr.mxu0 0.0
    %287 = vmatpush1.msra.mxu0 0.0
    %288 = vmatprep.subr.mxu0 0.0
    %289 = vmatpush1.msra.mxu0 0.0
    %290 = vmatprep.subr.mxu0 0.0
    %291 = vmatpush1.msra.mxu0 0.0
    %292 = vmatprep.subr.mxu0 0.0
    %293 = vmatpush1.msra.mxu0 0.0
    %294 = vmatprep.subr.mxu0 0.0
    %295 = vmatpush1.msra.mxu0 0.0
    %296 = vmatprep.subr.mxu0 0.0
    %297 = vmatpush1.msra.mxu0 0.0
    %298 = vmatprep.subr.mxu0 0.0
    %299 = vmatpush1.msra.mxu0 0.0
    %300 = vmatprep.subr.mxu0 0.0
    %301 = vmatpush1.msra.mxu0 0.0
    %302 = vmatprep.subr.mxu0 0.0
    %303 = vmatpush1.msra.mxu0 0.0
    %304 = vmatprep.mubr.f32.mxu0 0.0
    %v305 = vand.u32 %v60, 4294901760
    %v306 = vsub.f32 %v60, %v305
    %307 = vmatmul.mubr.f32.gmra.mrb[0].mxu0 %v306
    %v308 = vpop.f32.mrb[0].mxu0
    %v309 = vadd.f32 %v229, %v308
    %v310 = vpop.f32.mrb[0].mxu0
    %311 = vdwg.mxu0
    %312 = vmatprep.subr.mxu0 0.0
    %v313 = vand.u32 %v54, 4294901760
    %314 = vmatpush1.msra.mxu0 %v313
    %315 = vmatprep.subr.mxu0 0.0
    %v316 = vand.u32 %v55, 4294901760
    %317 = vmatpush1.msra.mxu0 %v316
    %318 = vmatprep.subr.mxu0 0.0
    %v319 = vand.u32 %v56, 4294901760
    %320 = vmatpush1.msra.mxu0 %v319
    %321 = vmatprep.subr.mxu0 0.0
    %v322 = vand.u32 %v57, 4294901760
    %323 = vmatpush1.msra.mxu0 %v322
    %324 = vmatprep.subr.mxu0 0.0
    %325 = vmatpush1.msra.mxu0 0.0
    %326 = vmatprep.subr.mxu0 0.0
    %327 = vmatpush1.msra.mxu0 0.0
    %328 = vmatprep.subr.mxu0 0.0
    %329 = vmatpush1.msra.mxu0 0.0
    %330 = vmatprep.subr.mxu0 0.0
    %331 = vmatpush1.msra.mxu0 0.0
    %332 = vmatprep.subr.mxu0 0.0
    %333 = vmatpush1.msra.mxu0 0.0
    %334 = vmatprep.subr.mxu0 0.0
    %335 = vmatpush1.msra.mxu0 0.0
    %336 = vmatprep.subr.mxu0 0.0
    %337 = vmatpush1.msra.mxu0 0.0
    %338 = vmatprep.subr.mxu0 0.0
    %339 = vmatpush1.msra.mxu0 0.0
    %340 = vmatprep.subr.mxu0 0.0
    %341 = vmatpush1.msra.mxu0 0.0
    %342 = vmatprep.subr.mxu0 0.0
    %343 = vmatpush1.msra.mxu0 0.0
    %344 = vmatprep.subr.mxu0 0.0
    %345 = vmatpush1.msra.mxu0 0.0
    %346 = vmatprep.subr.mxu0 0.0
    %347 = vmatpush1.msra.mxu0 0.0
    %348 = vmatprep.subr.mxu0 0.0
    %349 = vmatpush1.msra.mxu0 0.0
    %350 = vmatprep.subr.mxu0 0.0
    %351 = vmatpush1.msra.mxu0 0.0
    %352 = vmatprep.subr.mxu0 0.0
    %353 = vmatpush1.msra.mxu0 0.0
    %354 = vmatprep.subr.mxu0 0.0
    %355 = vmatpush1.msra.mxu0 0.0
    %356 = vmatprep.subr.mxu0 0.0
    %357 = vmatpush1.msra.mxu0 0.0
    %358 = vmatprep.subr.mxu0 0.0
    %359 = vmatpush1.msra.mxu0 0.0
    %360 = vmatprep.subr.mxu0 0.0
    %361 = vmatpush1.msra.mxu0 0.0
    %362 = vmatprep.subr.mxu0 0.0
    %363 = vmatpush1.msra.mxu0 0.0
    %364 = vmatprep.subr.mxu0 0.0
    %365 = vmatpush1.msra.mxu0 0.0
    %366 = vmatprep.subr.mxu0 0.0
    %367 = vmatpush1.msra.mxu0 0.0
    %368 = vmatprep.subr.mxu0 0.0
    %369 = vmatpush1.msra.mxu0 0.0
    %370 = vmatprep.subr.mxu0 0.0
    %371 = vmatpush1.msra.mxu0 0.0
    %372 = vmatprep.subr.mxu0 0.0
    %373 = vmatpush1.msra.mxu0 0.0
    %374 = vmatprep.subr.mxu0 0.0
    %375 = vmatpush1.msra.mxu0 0.0
    %376 = vmatprep.subr.mxu0 0.0
    %377 = vmatpush1.msra.mxu0 0.0
    %378 = vmatprep.subr.mxu0 0.0
    %379 = vmatpush1.msra.mxu0 0.0
    %380 = vmatprep.mubr.f32.mxu0 0.0
    %v381 = vand.u32 %v60, 4294901760
    %v382 = vsub.f32 %v60, %v381
    %v383 = vand.u32 %v382, 4294901760
    %384 = vmatmul.mubr.f32.gmra.mrb[0].mxu0 %v383
    %v385 = vpop.f32.mrb[0].mxu0
    %v386 = vadd.f32 %v309, %v385
    %v387 = vpop.f32.mrb[0].mxu0
    %388 = vdwg.mxu0
    %389 = vmatprep.subr.mxu0 0.0
    %v390 = vand.u32 %v54, 4294901760
    %v391 = vsub.f32 %v54, %v390
    %v392 = vand.u32 %v391, 4294901760
    %393 = vmatpush1.msra.mxu0 %v392
    %394 = vmatprep.subr.mxu0 0.0
    %v395 = vand.u32 %v55, 4294901760
    %v396 = vsub.f32 %v55, %v395
    %v397 = vand.u32 %v396, 4294901760
    %398 = vmatpush1.msra.mxu0 %v397
    %399 = vmatprep.subr.mxu0 0.0
    %v400 = vand.u32 %v56, 4294901760
    %v401 = vsub.f32 %v56, %v400
    %v402 = vand.u32 %v401, 4294901760
    %403 = vmatpush1.msra.mxu0 %v402
    %404 = vmatprep.subr.mxu0 0.0
    %v405 = vand.u32 %v57, 4294901760
    %v406 = vsub.f32 %v57, %v405
    %v407 = vand.u32 %v406, 4294901760
    %408 = vmatpush1.msra.mxu0 %v407
    %409 = vmatprep.subr.mxu0 0.0
    %410 = vmatpush1.msra.mxu0 0.0
    %411 = vmatprep.subr.mxu0 0.0
    %412 = vmatpush1.msra.mxu0 0.0
    %413 = vmatprep.subr.mxu0 0.0
    %414 = vmatpush1.msra.mxu0 0.0
    %415 = vmatprep.subr.mxu0 0.0
    %416 = vmatpush1.msra.mxu0 0.0
    %417 = vmatprep.subr.mxu0 0.0
    %418 = vmatpush1.msra.mxu0 0.0
    %419 = vmatprep.subr.mxu0 0.0
    %420 = vmatpush1.msra.mxu0 0.0
    %421 = vmatprep.subr.mxu0 0.0
    %422 = vmatpush1.msra.mxu0 0.0
    %423 = vmatprep.subr.mxu0 0.0
    %424 = vmatpush1.msra.mxu0 0.0
    %425 = vmatprep.subr.mxu0 0.0
    %426 = vmatpush1.msra.mxu0 0.0
    %427 = vmatprep.subr.mxu0 0.0
    %428 = vmatpush1.msra.mxu0 0.0
    %429 = vmatprep.subr.mxu0 0.0
    %430 = vmatpush1.msra.mxu0 0.0
    %431 = vmatprep.subr.mxu0 0.0
    %432 = vmatpush1.msra.mxu0 0.0
    %433 = vmatprep.subr.mxu0 0.0
    %434 = vmatpush1.msra.mxu0 0.0
    %435 = vmatprep.subr.mxu0 0.0
    %436 = vmatpush1.msra.mxu0 0.0
    %437 = vmatprep.subr.mxu0 0.0
    %438 = vmatpush1.msra.mxu0 0.0
    %439 = vmatprep.subr.mxu0 0.0
    %440 = vmatpush1.msra.mxu0 0.0
    %441 = vmatprep.subr.mxu0 0.0
    %442 = vmatpush1.msra.mxu0 0.0
    %443 = vmatprep.subr.mxu0 0.0
    %444 = vmatpush1.msra.mxu0 0.0
    %445 = vmatprep.subr.mxu0 0.0
    %446 = vmatpush1.msra.mxu0 0.0
    %447 = vmatprep.subr.mxu0 0.0
    %448 = vmatpush1.msra.mxu0 0.0
    %449 = vmatprep.subr.mxu0 0.0
    %450 = vmatpush1.msra.mxu0 0.0
    %451 = vmatprep.subr.mxu0 0.0
    %452 = vmatpush1.msra.mxu0 0.0
    %453 = vmatprep.subr.mxu0 0.0
    %454 = vmatpush1.msra.mxu0 0.0
    %455 = vmatprep.subr.mxu0 0.0
    %456 = vmatpush1.msra.mxu0 0.0
    %457 = vmatprep.subr.mxu0 0.0
    %458 = vmatpush1.msra.mxu0 0.0
    %459 = vmatprep.subr.mxu0 0.0
    %460 = vmatpush1.msra.mxu0 0.0
    %461 = vmatprep.subr.mxu0 0.0
    %462 = vmatpush1.msra.mxu0 0.0
    %463 = vmatprep.subr.mxu0 0.0
    %464 = vmatpush1.msra.mxu0 0.0
    %465 = vmatprep.mubr.f32.mxu0 0.0
    %v466 = vand.u32 %v60, 4294901760
    %467 = vmatmul.mubr.f32.gmra.mrb[0].mxu0 %v466
    %v468 = vpop.f32.mrb[0].mxu0
    %v469 = vadd.f32 %v386, %v468
    %v470 = vpop.f32.mrb[0].mxu0
    %471 = vdwg.mxu0
    %472 = vmatprep.subr.mxu0 0.0
    %v473 = vand.u32 %v54, 4294901760
    %474 = vmatpush1.msra.mxu0 %v473
    %475 = vmatprep.subr.mxu0 0.0
    %v476 = vand.u32 %v55, 4294901760
    %477 = vmatpush1.msra.mxu0 %v476
    %478 = vmatprep.subr.mxu0 0.0
    %v479 = vand.u32 %v56, 4294901760
    %480 = vmatpush1.msra.mxu0 %v479
    %481 = vmatprep.subr.mxu0 0.0
    %v482 = vand.u32 %v57, 4294901760
    %483 = vmatpush1.msra.mxu0 %v482
    %484 = vmatprep.subr.mxu0 0.0
    %485 = vmatpush1.msra.mxu0 0.0
    %486 = vmatprep.subr.mxu0 0.0
    %487 = vmatpush1.msra.mxu0 0.0
    %488 = vmatprep.subr.mxu0 0.0
    %489 = vmatpush1.msra.mxu0 0.0
    %490 = vmatprep.subr.mxu0 0.0
    %491 = vmatpush1.msra.mxu0 0.0
    %492 = vmatprep.subr.mxu0 0.0
    %493 = vmatpush1.msra.mxu0 0.0
    %494 = vmatprep.subr.mxu0 0.0
    %495 = vmatpush1.msra.mxu0 0.0
    %496 = vmatprep.subr.mxu0 0.0
    %497 = vmatpush1.msra.mxu0 0.0
    %498 = vmatprep.subr.mxu0 0.0
    %499 = vmatpush1.msra.mxu0 0.0
    %500 = vmatprep.subr.mxu0 0.0
    %501 = vmatpush1.msra.mxu0 0.0
    %502 = vmatprep.subr.mxu0 0.0
    %503 = vmatpush1.msra.mxu0 0.0
    %504 = vmatprep.subr.mxu0 0.0
    %505 = vmatpush1.msra.mxu0 0.0
    %506 = vmatprep.subr.mxu0 0.0
    %507 = vmatpush1.msra.mxu0 0.0
    %508 = vmatprep.subr.mxu0 0.0
    %509 = vmatpush1.msra.mxu0 0.0
    %510 = vmatprep.subr.mxu0 0.0
    %511 = vmatpush1.msra.mxu0 0.0
    %512 = vmatprep.subr.mxu0 0.0
    %513 = vmatpush1.msra.mxu0 0.0
    %514 = vmatprep.subr.mxu0 0.0
    %515 = vmatpush1.msra.mxu0 0.0
    %516 = vmatprep.subr.mxu0 0.0
    %517 = vmatpush1.msra.mxu0 0.0
    %518 = vmatprep.subr.mxu0 0.0
    %519 = vmatpush1.msra.mxu0 0.0
    %520 = vmatprep.subr.mxu0 0.0
    %521 = vmatpush1.msra.mxu0 0.0
    %522 = vmatprep.subr.mxu0 0.0
    %523 = vmatpush1.msra.mxu0 0.0
    %524 = vmatprep.subr.mxu0 0.0
    %525 = vmatpush1.msra.mxu0 0.0
    %526 = vmatprep.subr.mxu0 0.0
    %527 = vmatpush1.msra.mxu0 0.0
    %528 = vmatprep.subr.mxu0 0.0
    %529 = vmatpush1.msra.mxu0 0.0
    %530 = vmatprep.subr.mxu0 0.0
    %531 = vmatpush1.msra.mxu0 0.0
    %532 = vmatprep.subr.mxu0 0.0
    %533 = vmatpush1.msra.mxu0 0.0
    %534 = vmatprep.subr.mxu0 0.0
    %535 = vmatpush1.msra.mxu0 0.0
    %536 = vmatprep.subr.mxu0 0.0
    %537 = vmatpush1.msra.mxu0 0.0
    %538 = vmatprep.subr.mxu0 0.0
    %539 = vmatpush1.msra.mxu0 0.0
    %540 = vmatprep.mubr.f32.mxu0 0.0
    %v541 = vand.u32 %v60, 4294901760
    %542 = vmatmul.mubr.f32.gmra.mrb[0].mxu0 %v541
    %v543 = vpop.f32.mrb[0].mxu0
    %v544 = vadd.f32 %v469, %v543
    %v545 = vpop.f32.mrb[0].mxu0
    %546 = vdwg.mxu0
    %vm547 = vcmask 523264
    %v549 = vsel %vm547, %v45, 0
    %551 = vmatprep.subr.mxu0 0.0
    %v552 = vand.u32 %v46, 4294901760
    %553 = vmatpush1.msra.mxu0 %v552
    %554 = vmatprep.subr.mxu0 0.0
    %v555 = vand.u32 %v47, 4294901760
    %556 = vmatpush1.msra.mxu0 %v555
    %557 = vmatprep.subr.mxu0 0.0
    %v558 = vand.u32 %v48, 4294901760
    %559 = vmatpush1.msra.mxu0 %v558
    %560 = vmatprep.subr.mxu0 0.0
    %v561 = vand.u32 %v49, 4294901760
    %562 = vmatpush1.msra.mxu0 %v561
    %563 = vmatprep.subr.mxu0 0.0
    %v564 = vand.u32 %v50, 4294901760
    %565 = vmatpush1.msra.mxu0 %v564
    %566 = vmatprep.subr.mxu0 0.0
    %v567 = vand.u32 %v51, 4294901760
    %568 = vmatpush1.msra.mxu0 %v567
    %569 = vmatprep.subr.mxu0 0.0
    %v570 = vand.u32 %v52, 4294901760
    %571 = vmatpush1.msra.mxu0 %v570
    %572 = vmatprep.subr.mxu0 0.0
    %v573 = vand.u32 %v53, 4294901760
    %574 = vmatpush1.msra.mxu0 %v573
    %575 = vmatprep.subr.mxu0 0.0
    %576 = vmatpush1.msra.mxu0 0.0
    %577 = vmatprep.subr.mxu0 0.0
    %578 = vmatpush1.msra.mxu0 0.0
    %579 = vmatprep.subr.mxu0 0.0
    %580 = vmatpush1.msra.mxu0 0.0
    %581 = vmatprep.subr.mxu0 0.0
    %582 = vmatpush1.msra.mxu0 0.0
    %583 = vmatprep.subr.mxu0 0.0
    %584 = vmatpush1.msra.mxu0 0.0
    %585 = vmatprep.subr.mxu0 0.0
    %586 = vmatpush1.msra.mxu0 0.0
    %587 = vmatprep.subr.mxu0 0.0
    %588 = vmatpush1.msra.mxu0 0.0
    %589 = vmatprep.subr.mxu0 0.0
    %590 = vmatpush1.msra.mxu0 0.0
    %591 = vmatprep.subr.mxu0 0.0
    %592 = vmatpush1.msra.mxu0 0.0
    %593 = vmatprep.subr.mxu0 0.0
    %594 = vmatpush1.msra.mxu0 0.0
    %595 = vmatprep.subr.mxu0 0.0
    %596 = vmatpush1.msra.mxu0 0.0
    %597 = vmatprep.subr.mxu0 0.0
    %598 = vmatpush1.msra.mxu0 0.0
    %599 = vmatprep.subr.mxu0 0.0
    %600 = vmatpush1.msra.mxu0 0.0
    %601 = vmatprep.subr.mxu0 0.0
    %602 = vmatpush1.msra.mxu0 0.0
    %603 = vmatprep.subr.mxu0 0.0
    %604 = vmatpush1.msra.mxu0 0.0
    %605 = vmatprep.subr.mxu0 0.0
    %606 = vmatpush1.msra.mxu0 0.0
    %607 = vmatprep.subr.mxu0 0.0
    %608 = vmatpush1.msra.mxu0 0.0
    %609 = vmatprep.subr.mxu0 0.0
    %610 = vmatpush1.msra.mxu0 0.0
    %611 = vmatprep.subr.mxu0 0.0
    %612 = vmatpush1.msra.mxu0 0.0
    %613 = vmatprep.subr.mxu0 0.0
    %614 = vmatpush1.msra.mxu0 0.0
    %615 = vmatprep.subr.mxu0 0.0
    %616 = vmatpush1.msra.mxu0 0.0
    %617 = vmatprep.subr.mxu0 0.0
    %618 = vmatpush1.msra.mxu0 0.0
    %619 = vmatprep.subr.mxu0 0.0
    %620 = vmatpush1.msra.mxu0 0.0
    %621 = vmatprep.subr.mxu0 0.0
    %622 = vmatpush1.msra.mxu0 0.0
    %623 = vmatprep.mubr.f32.mxu0 0.0
    %v624 = vand.u32 %v549, 4294901760
    %v625 = vsub.f32 %v549, %v624
    %v626 = vand.u32 %v625, 4294901760
    %v627 = vsub.f32 %v625, %v626
    %v628 = vand.u32 %v627, 4294901760
    %629 = vmatmul.mubr.f32.gmra.mrb[0].mxu0 %v628
    %v630 = vpop.f32.mrb[0].mxu0
    %v631 = vadd.f32 %v544, %v630
    %v632 = vpop.f32.mrb[0].mxu0
    %633 = vdwg.mxu0
    %634 = vmatprep.subr.mxu0 0.0
    %v635 = vand.u32 %v46, 4294901760
    %v636 = vsub.f32 %v46, %v635
    %v637 = vand.u32 %v636, 4294901760
    %v638 = vsub.f32 %v636, %v637
    %v639 = vand.u32 %v638, 4294901760
    %640 = vmatpush1.msra.mxu0 %v639
    %641 = vmatprep.subr.mxu0 0.0
    %v642 = vand.u32 %v47, 4294901760
    %v643 = vsub.f32 %v47, %v642
    %v644 = vand.u32 %v643, 4294901760
    %v645 = vsub.f32 %v643, %v644
    %v646 = vand.u32 %v645, 4294901760
    %647 = vmatpush1.msra.mxu0 %v646
    %648 = vmatprep.subr.mxu0 0.0
    %v649 = vand.u32 %v48, 4294901760
    %v650 = vsub.f32 %v48, %v649
    %v651 = vand.u32 %v650, 4294901760
    %v652 = vsub.f32 %v650, %v651
    %v653 = vand.u32 %v652, 4294901760
    %654 = vmatpush1.msra.mxu0 %v653
    %655 = vmatprep.subr.mxu0 0.0
    %v656 = vand.u32 %v49, 4294901760
    %v657 = vsub.f32 %v49, %v656
    %v658 = vand.u32 %v657, 4294901760
    %v659 = vsub.f32 %v657, %v658
    %v660 = vand.u32 %v659, 4294901760
    %661 = vmatpush1.msra.mxu0 %v660
    %662 = vmatprep.subr.mxu0 0.0
    %v663 = vand.u32 %v50, 4294901760
    %v664 = vsub.f32 %v50, %v663
    %v665 = vand.u32 %v664, 4294901760
    %v666 = vsub.f32 %v664, %v665
    %v667 = vand.u32 %v666, 4294901760
    %668 = vmatpush1.msra.mxu0 %v667
    %669 = vmatprep.subr.mxu0 0.0
    %v670 = vand.u32 %v51, 4294901760
    %v671 = vsub.f32 %v51, %v670
    %v672 = vand.u32 %v671, 4294901760
    %v673 = vsub.f32 %v671, %v672
    %v674 = vand.u32 %v673, 4294901760
    %675 = vmatpush1.msra.mxu0 %v674
    %676 = vmatprep.subr.mxu0 0.0
    %v677 = vand.u32 %v52, 4294901760
    %v678 = vsub.f32 %v52, %v677
    %v679 = vand.u32 %v678, 4294901760
    %v680 = vsub.f32 %v678, %v679
    %v681 = vand.u32 %v680, 4294901760
    %682 = vmatpush1.msra.mxu0 %v681
    %683 = vmatprep.subr.mxu0 0.0
    %v684 = vand.u32 %v53, 4294901760
    %v685 = vsub.f32 %v53, %v684
    %v686 = vand.u32 %v685, 4294901760
    %v687 = vsub.f32 %v685, %v686
    %v688 = vand.u32 %v687, 4294901760
    %689 = vmatpush1.msra.mxu0 %v688
    %690 = vmatprep.subr.mxu0 0.0
    %691 = vmatpush1.msra.mxu0 0.0
    %692 = vmatprep.subr.mxu0 0.0
    %693 = vmatpush1.msra.mxu0 0.0
    %694 = vmatprep.subr.mxu0 0.0
    %695 = vmatpush1.msra.mxu0 0.0
    %696 = vmatprep.subr.mxu0 0.0
    %697 = vmatpush1.msra.mxu0 0.0
    %698 = vmatprep.subr.mxu0 0.0
    %699 = vmatpush1.msra.mxu0 0.0
    %700 = vmatprep.subr.mxu0 0.0
    %701 = vmatpush1.msra.mxu0 0.0
    %702 = vmatprep.subr.mxu0 0.0
    %703 = vmatpush1.msra.mxu0 0.0
    %704 = vmatprep.subr.mxu0 0.0
    %705 = vmatpush1.msra.mxu0 0.0
    %706 = vmatprep.subr.mxu0 0.0
    %707 = vmatpush1.msra.mxu0 0.0
    %708 = vmatprep.subr.mxu0 0.0
    %709 = vmatpush1.msra.mxu0 0.0
    %710 = vmatprep.subr.mxu0 0.0
    %711 = vmatpush1.msra.mxu0 0.0
    %712 = vmatprep.subr.mxu0 0.0
    %713 = vmatpush1.msra.mxu0 0.0
    %714 = vmatprep.subr.mxu0 0.0
    %715 = vmatpush1.msra.mxu0 0.0
    %716 = vmatprep.subr.mxu0 0.0
    %717 = vmatpush1.msra.mxu0 0.0
    %718 = vmatprep.subr.mxu0 0.0
    %719 = vmatpush1.msra.mxu0 0.0
    %720 = vmatprep.subr.mxu0 0.0
    %721 = vmatpush1.msra.mxu0 0.0
    %722 = vmatprep.subr.mxu0 0.0
    %723 = vmatpush1.msra.mxu0 0.0
    %724 = vmatprep.subr.mxu0 0.0
    %725 = vmatpush1.msra.mxu0 0.0
    %726 = vmatprep.subr.mxu0 0.0
    %727 = vmatpush1.msra.mxu0 0.0
    %728 = vmatprep.subr.mxu0 0.0
    %729 = vmatpush1.msra.mxu0 0.0
    %730 = vmatprep.subr.mxu0 0.0
    %731 = vmatpush1.msra.mxu0 0.0
    %732 = vmatprep.subr.mxu0 0.0
    %733 = vmatpush1.msra.mxu0 0.0
    %734 = vmatprep.subr.mxu0 0.0
    %735 = vmatpush1.msra.mxu0 0.0
    %736 = vmatprep.subr.mxu0 0.0
    %737 = vmatpush1.msra.mxu0 0.0
    %738 = vmatprep.mubr.f32.mxu0 0.0
    %v739 = vand.u32 %v549, 4294901760
    %740 = vmatmul.mubr.f32.gmra.mrb[0].mxu0 %v739
    %v741 = vpop.f32.mrb[0].mxu0
    %v742 = vadd.f32 %v631, %v741
    %v743 = vpop.f32.mrb[0].mxu0
    %744 = vdwg.mxu0
    %745 = vmatprep.subr.mxu0 0.0
    %v746 = vand.u32 %v46, 4294901760
    %v747 = vsub.f32 %v46, %v746
    %748 = vmatpush1.msra.mxu0 %v747
    %749 = vmatprep.subr.mxu0 0.0
    %v750 = vand.u32 %v47, 4294901760
    %v751 = vsub.f32 %v47, %v750
    %752 = vmatpush1.msra.mxu0 %v751
    %753 = vmatprep.subr.mxu0 0.0
    %v754 = vand.u32 %v48, 4294901760
    %v755 = vsub.f32 %v48, %v754
    %756 = vmatpush1.msra.mxu0 %v755
    %757 = vmatprep.subr.mxu0 0.0
    %v758 = vand.u32 %v49, 4294901760
    %v759 = vsub.f32 %v49, %v758
    %760 = vmatpush1.msra.mxu0 %v759
    %761 = vmatprep.subr.mxu0 0.0
    %v762 = vand.u32 %v50, 4294901760
    %v763 = vsub.f32 %v50, %v762
    %764 = vmatpush1.msra.mxu0 %v763
    %765 = vmatprep.subr.mxu0 0.0
    %v766 = vand.u32 %v51, 4294901760
    %v767 = vsub.f32 %v51, %v766
    %768 = vmatpush1.msra.mxu0 %v767
    %769 = vmatprep.subr.mxu0 0.0
    %v770 = vand.u32 %v52, 4294901760
    %v771 = vsub.f32 %v52, %v770
    %772 = vmatpush1.msra.mxu0 %v771
    %773 = vmatprep.subr.mxu0 0.0
    %v774 = vand.u32 %v53, 4294901760
    %v775 = vsub.f32 %v53, %v774
    %776 = vmatpush1.msra.mxu0 %v775
    %777 = vmatprep.subr.mxu0 0.0
    %778 = vmatpush1.msra.mxu0 0.0
    %779 = vmatprep.subr.mxu0 0.0
    %780 = vmatpush1.msra.mxu0 0.0
    %781 = vmatprep.subr.mxu0 0.0
    %782 = vmatpush1.msra.mxu0 0.0
    %783 = vmatprep.subr.mxu0 0.0
    %784 = vmatpush1.msra.mxu0 0.0
    %785 = vmatprep.subr.mxu0 0.0
    %786 = vmatpush1.msra.mxu0 0.0
    %787 = vmatprep.subr.mxu0 0.0
    %788 = vmatpush1.msra.mxu0 0.0
    %789 = vmatprep.subr.mxu0 0.0
    %790 = vmatpush1.msra.mxu0 0.0
    %791 = vmatprep.subr.mxu0 0.0
    %792 = vmatpush1.msra.mxu0 0.0
    %793 = vmatprep.subr.mxu0 0.0
    %794 = vmatpush1.msra.mxu0 0.0
    %795 = vmatprep.subr.mxu0 0.0
    %796 = vmatpush1.msra.mxu0 0.0
    %797 = vmatprep.subr.mxu0 0.0
    %798 = vmatpush1.msra.mxu0 0.0
    %799 = vmatprep.subr.mxu0 0.0
    %800 = vmatpush1.msra.mxu0 0.0
    %801 = vmatprep.subr.mxu0 0.0
    %802 = vmatpush1.msra.mxu0 0.0
    %803 = vmatprep.subr.mxu0 0.0
    %804 = vmatpush1.msra.mxu0 0.0
    %805 = vmatprep.subr.mxu0 0.0
    %806 = vmatpush1.msra.mxu0 0.0
    %807 = vmatprep.subr.mxu0 0.0
    %808 = vmatpush1.msra.mxu0 0.0
    %809 = vmatprep.subr.mxu0 0.0
    %810 = vmatpush1.msra.mxu0 0.0
    %811 = vmatprep.subr.mxu0 0.0
    %812 = vmatpush1.msra.mxu0 0.0
    %813 = vmatprep.subr.mxu0 0.0
    %814 = vmatpush1.msra.mxu0 0.0
    %815 = vmatprep.subr.mxu0 0.0
    %816 = vmatpush1.msra.mxu0 0.0
    %817 = vmatprep.subr.mxu0 0.0
    %818 = vmatpush1.msra.mxu0 0.0
    %819 = vmatprep.subr.mxu0 0.0
    %820 = vmatpush1.msra.mxu0 0.0
    %821 = vmatprep.subr.mxu0 0.0
    %822 = vmatpush1.msra.mxu0 0.0
    %823 = vmatprep.subr.mxu0 0.0
    %824 = vmatpush1.msra.mxu0 0.0
    %825 = vmatprep.mubr.f32.mxu0 0.0
    %v826 = vand.u32 %v549, 4294901760
    %v827 = vsub.f32 %v549, %v826
    %828 = vmatmul.mubr.f32.gmra.mrb[0].mxu0 %v827
    %v829 = vpop.f32.mrb[0].mxu0
    %v830 = vadd.f32 %v742, %v829
    %v831 = vpop.f32.mrb[0].mxu0
    %832 = vdwg.mxu0
    %833 = vmatprep.subr.mxu0 0.0
    %v834 = vand.u32 %v46, 4294901760
    %835 = vmatpush1.msra.mxu0 %v834
    %836 = vmatprep.subr.mxu0 0.0
    %v837 = vand.u32 %v47, 4294901760
    %838 = vmatpush1.msra.mxu0 %v837
    %839 = vmatprep.subr.mxu0 0.0
    %v840 = vand.u32 %v48, 4294901760
    %841 = vmatpush1.msra.mxu0 %v840
    %842 = vmatprep.subr.mxu0 0.0
    %v843 = vand.u32 %v49, 4294901760
    %844 = vmatpush1.msra.mxu0 %v843
    %845 = vmatprep.subr.mxu0 0.0
    %v846 = vand.u32 %v50, 4294901760
    %847 = vmatpush1.msra.mxu0 %v846
    %848 = vmatprep.subr.mxu0 0.0
    %v849 = vand.u32 %v51, 4294901760
    %850 = vmatpush1.msra.mxu0 %v849
    %851 = vmatprep.subr.mxu0 0.0
    %v852 = vand.u32 %v52, 4294901760
    %853 = vmatpush1.msra.mxu0 %v852
    %854 = vmatprep.subr.mxu0 0.0
    %v855 = vand.u32 %v53, 4294901760
    %856 = vmatpush1.msra.mxu0 %v855
    %857 = vmatprep.subr.mxu0 0.0
    %858 = vmatpush1.msra.mxu0 0.0
    %859 = vmatprep.subr.mxu0 0.0
    %860 = vmatpush1.msra.mxu0 0.0
    %861 = vmatprep.subr.mxu0 0.0
    %862 = vmatpush1.msra.mxu0 0.0
    %863 = vmatprep.subr.mxu0 0.0
    %864 = vmatpush1.msra.mxu0 0.0
    %865 = vmatprep.subr.mxu0 0.0
    %866 = vmatpush1.msra.mxu0 0.0
    %867 = vmatprep.subr.mxu0 0.0
    %868 = vmatpush1.msra.mxu0 0.0
    %869 = vmatprep.subr.mxu0 0.0
    %870 = vmatpush1.msra.mxu0 0.0
    %871 = vmatprep.subr.mxu0 0.0
    %872 = vmatpush1.msra.mxu0 0.0
    %873 = vmatprep.subr.mxu0 0.0
    %874 = vmatpush1.msra.mxu0 0.0
    %875 = vmatprep.subr.mxu0 0.0
    %876 = vmatpush1.msra.mxu0 0.0
    %877 = vmatprep.subr.mxu0 0.0
    %878 = vmatpush1.msra.mxu0 0.0
    %879 = vmatprep.subr.mxu0 0.0
    %880 = vmatpush1.msra.mxu0 0.0
    %881 = vmatprep.subr.mxu0 0.0
    %882 = vmatpush1.msra.mxu0 0.0
    %883 = vmatprep.subr.mxu0 0.0
    %884 = vmatpush1.msra.mxu0 0.0
    %885 = vmatprep.subr.mxu0 0.0
    %886 = vmatpush1.msra.mxu0 0.0
    %887 = vmatprep.subr.mxu0 0.0
    %888 = vmatpush1.msra.mxu0 0.0
    %889 = vmatprep.subr.mxu0 0.0
    %890 = vmatpush1.msra.mxu0 0.0
    %891 = vmatprep.subr.mxu0 0.0
    %892 = vmatpush1.msra.mxu0 0.0
    %893 = vmatprep.subr.mxu0 0.0
    %894 = vmatpush1.msra.mxu0 0.0
    %895 = vmatprep.subr.mxu0 0.0
    %896 = vmatpush1.msra.mxu0 0.0
    %897 = vmatprep.subr.mxu0 0.0
    %898 = vmatpush1.msra.mxu0 0.0
    %899 = vmatprep.subr.mxu0 0.0
    %900 = vmatpush1.msra.mxu0 0.0
    %901 = vmatprep.subr.mxu0 0.0
    %902 = vmatpush1.msra.mxu0 0.0
    %903 = vmatprep.subr.mxu0 0.0
    %904 = vmatpush1.msra.mxu0 0.0
    %905 = vmatprep.mubr.f32.mxu0 0.0
    %v906 = vand.u32 %v549, 4294901760
    %v907 = vsub.f32 %v549, %v906
    %v908 = vand.u32 %v907, 4294901760
    %909 = vmatmul.mubr.f32.gmra.mrb[0].mxu0 %v908
    %v910 = vpop.f32.mrb[0].mxu0
    %v911 = vadd.f32 %v830, %v910
    %v912 = vpop.f32.mrb[0].mxu0
    %913 = vdwg.mxu0
    %914 = vmatprep.subr.mxu0 0.0
    %v915 = vand.u32 %v46, 4294901760
    %v916 = vsub.f32 %v46, %v915
    %v917 = vand.u32 %v916, 4294901760
    %918 = vmatpush1.msra.mxu0 %v917
    %919 = vmatprep.subr.mxu0 0.0
    %v920 = vand.u32 %v47, 4294901760
    %v921 = vsub.f32 %v47, %v920
    %v922 = vand.u32 %v921, 4294901760
    %923 = vmatpush1.msra.mxu0 %v922
    %924 = vmatprep.subr.mxu0 0.0
    %v925 = vand.u32 %v48, 4294901760
    %v926 = vsub.f32 %v48, %v925
    %v927 = vand.u32 %v926, 4294901760
    %928 = vmatpush1.msra.mxu0 %v927
    %929 = vmatprep.subr.mxu0 0.0
    %v930 = vand.u32 %v49, 4294901760
    %v931 = vsub.f32 %v49, %v930
    %v932 = vand.u32 %v931, 4294901760
    %933 = vmatpush1.msra.mxu0 %v932
    %934 = vmatprep.subr.mxu0 0.0
    %v935 = vand.u32 %v50, 4294901760
    %v936 = vsub.f32 %v50, %v935
    %v937 = vand.u32 %v936, 4294901760
    %938 = vmatpush1.msra.mxu0 %v937
    %939 = vmatprep.subr.mxu0 0.0
    %v940 = vand.u32 %v51, 4294901760
    %v941 = vsub.f32 %v51, %v940
    %v942 = vand.u32 %v941, 4294901760
    %943 = vmatpush1.msra.mxu0 %v942
    %944 = vmatprep.subr.mxu0 0.0
    %v945 = vand.u32 %v52, 4294901760
    %v946 = vsub.f32 %v52, %v945
    %v947 = vand.u32 %v946, 4294901760
    %948 = vmatpush1.msra.mxu0 %v947
    %949 = vmatprep.subr.mxu0 0.0
    %v950 = vand.u32 %v53, 4294901760
    %v951 = vsub.f32 %v53, %v950
    %v952 = vand.u32 %v951, 4294901760
    %953 = vmatpush1.msra.mxu0 %v952
    %954 = vmatprep.subr.mxu0 0.0
    %955 = vmatpush1.msra.mxu0 0.0
    %956 = vmatprep.subr.mxu0 0.0
    %957 = vmatpush1.msra.mxu0 0.0
    %958 = vmatprep.subr.mxu0 0.0
    %959 = vmatpush1.msra.mxu0 0.0
    %960 = vmatprep.subr.mxu0 0.0
    %961 = vmatpush1.msra.mxu0 0.0
    %962 = vmatprep.subr.mxu0 0.0
    %963 = vmatpush1.msra.mxu0 0.0
    %964 = vmatprep.subr.mxu0 0.0
    %965 = vmatpush1.msra.mxu0 0.0
    %966 = vmatprep.subr.mxu0 0.0
    %967 = vmatpush1.msra.mxu0 0.0
    %968 = vmatprep.subr.mxu0 0.0
    %969 = vmatpush1.msra.mxu0 0.0
    %970 = vmatprep.subr.mxu0 0.0
    %971 = vmatpush1.msra.mxu0 0.0
    %972 = vmatprep.subr.mxu0 0.0
    %973 = vmatpush1.msra.mxu0 0.0
    %974 = vmatprep.subr.mxu0 0.0
    %975 = vmatpush1.msra.mxu0 0.0
    %976 = vmatprep.subr.mxu0 0.0
    %977 = vmatpush1.msra.mxu0 0.0
    %978 = vmatprep.subr.mxu0 0.0
    %979 = vmatpush1.msra.mxu0 0.0
    %980 = vmatprep.subr.mxu0 0.0
    %981 = vmatpush1.msra.mxu0 0.0
    %982 = vmatprep.subr.mxu0 0.0
    %983 = vmatpush1.msra.mxu0 0.0
    %984 = vmatprep.subr.mxu0 0.0
    %985 = vmatpush1.msra.mxu0 0.0
    %986 = vmatprep.subr.mxu0 0.0
    %987 = vmatpush1.msra.mxu0 0.0
    %988 = vmatprep.subr.mxu0 0.0
    %989 = vmatpush1.msra.mxu0 0.0
    %990 = vmatprep.subr.mxu0 0.0
    %991 = vmatpush1.msra.mxu0 0.0
    %992 = vmatprep.subr.mxu0 0.0
    %993 = vmatpush1.msra.mxu0 0.0
    %994 = vmatprep.subr.mxu0 0.0
    %995 = vmatpush1.msra.mxu0 0.0
    %996 = vmatprep.subr.mxu0 0.0
    %997 = vmatpush1.msra.mxu0 0.0
    %998 = vmatprep.subr.mxu0 0.0
    %999 = vmatpush1.msra.mxu0 0.0
    %1000 = vmatprep.subr.mxu0 0.0
    %1001 = vmatpush1.msra.mxu0 0.0
    %1002 = vmatprep.mubr.f32.mxu0 0.0
    %v1003 = vand.u32 %v549, 4294901760
    %1004 = vmatmul.mubr.f32.gmra.mrb[0].mxu0 %v1003
    %v1005 = vpop.f32.mrb[0].mxu0
    %v1006 = vadd.f32 %v911, %v1005
    %v1007 = vpop.f32.mrb[0].mxu0
    %1008 = vdwg.mxu0
    %1009 = vmatprep.subr.mxu0 0.0
    %v1010 = vand.u32 %v46, 4294901760
    %1011 = vmatpush1.msra.mxu0 %v1010
    %1012 = vmatprep.subr.mxu0 0.0
    %v1013 = vand.u32 %v47, 4294901760
    %1014 = vmatpush1.msra.mxu0 %v1013
    %1015 = vmatprep.subr.mxu0 0.0
    %v1016 = vand.u32 %v48, 4294901760
    %1017 = vmatpush1.msra.mxu0 %v1016
    %1018 = vmatprep.subr.mxu0 0.0
    %v1019 = vand.u32 %v49, 4294901760
    %1020 = vmatpush1.msra.mxu0 %v1019
    %1021 = vmatprep.subr.mxu0 0.0
    %v1022 = vand.u32 %v50, 4294901760
    %1023 = vmatpush1.msra.mxu0 %v1022
    %1024 = vmatprep.subr.mxu0 0.0
    %v1025 = vand.u32 %v51, 4294901760
    %1026 = vmatpush1.msra.mxu0 %v1025
    %1027 = vmatprep.subr.mxu0 0.0
    %v1028 = vand.u32 %v52, 4294901760
    %1029 = vmatpush1.msra.mxu0 %v1028
    %1030 = vmatprep.subr.mxu0 0.0
    %v1031 = vand.u32 %v53, 4294901760
    %1032 = vmatpush1.msra.mxu0 %v1031
    %1033 = vmatprep.subr.mxu0 0.0
    %1034 = vmatpush1.msra.mxu0 0.0
    %1035 = vmatprep.subr.mxu0 0.0
    %1036 = vmatpush1.msra.mxu0 0.0
    %1037 = vmatprep.subr.mxu0 0.0
    %1038 = vmatpush1.msra.mxu0 0.0
    %1039 = vmatprep.subr.mxu0 0.0
    %1040 = vmatpush1.msra.mxu0 0.0
    %1041 = vmatprep.subr.mxu0 0.0
    %1042 = vmatpush1.msra.mxu0 0.0
    %1043 = vmatprep.subr.mxu0 0.0
    %1044 = vmatpush1.msra.mxu0 0.0
    %1045 = vmatprep.subr.mxu0 0.0
    %1046 = vmatpush1.msra.mxu0 0.0
    %1047 = vmatprep.subr.mxu0 0.0
    %1048 = vmatpush1.msra.mxu0 0.0
    %1049 = vmatprep.subr.mxu0 0.0
    %1050 = vmatpush1.msra.mxu0 0.0
    %1051 = vmatprep.subr.mxu0 0.0
    %1052 = vmatpush1.msra.mxu0 0.0
    %1053 = vmatprep.subr.mxu0 0.0
    %1054 = vmatpush1.msra.mxu0 0.0
    %1055 = vmatprep.subr.mxu0 0.0
    %1056 = vmatpush1.msra.mxu0 0.0
    %1057 = vmatprep.subr.mxu0 0.0
    %1058 = vmatpush1.msra.mxu0 0.0
    %1059 = vmatprep.subr.mxu0 0.0
    %1060 = vmatpush1.msra.mxu0 0.0
    %1061 = vmatprep.subr.mxu0 0.0
    %1062 = vmatpush1.msra.mxu0 0.0
    %1063 = vmatprep.subr.mxu0 0.0
    %1064 = vmatpush1.msra.mxu0 0.0
    %1065 = vmatprep.subr.mxu0 0.0
    %1066 = vmatpush1.msra.mxu0 0.0
    %1067 = vmatprep.subr.mxu0 0.0
    %1068 = vmatpush1.msra.mxu0 0.0
    %1069 = vmatprep.subr.mxu0 0.0
    %1070 = vmatpush1.msra.mxu0 0.0
    %1071 = vmatprep.subr.mxu0 0.0
    %1072 = vmatpush1.msra.mxu0 0.0
    %1073 = vmatprep.subr.mxu0 0.0
    %1074 = vmatpush1.msra.mxu0 0.0
    %1075 = vmatprep.subr.mxu0 0.0
    %1076 = vmatpush1.msra.mxu0 0.0
    %1077 = vmatprep.subr.mxu0 0.0
    %1078 = vmatpush1.msra.mxu0 0.0
    %1079 = vmatprep.subr.mxu0 0.0
    %1080 = vmatpush1.msra.mxu0 0.0
    %1081 = vmatprep.mubr.f32.mxu0 0.0
    %v1082 = vand.u32 %v549, 4294901760
    %1083 = vmatmul.mubr.f32.gmra.mrb[0].mxu0 %v1082
    %v1084 = vpop.f32.mrb[0].mxu0
    %v1085 = vadd.f32 %v1006, %v1084
    %v1086 = vpop.f32.mrb[0].mxu0
    %1087 = vdwg.mxu0
    %v1088 = vld [vmem:[#allocation3 + $0xc0] sm:$0x1]
    %v1089 = vlaneseq
    %v1090 = vshrl.u32 %v1089, 7
    %v1091 = vsub.s32 0, %v1090
    %v1092 = vrot.slane %v1088, %v1091
    %v1093 = vadd.f32 %v1085, %v1092
    %v1094 = vxor.u32 %v1093, 2147483648
    %v1095 = vmul.f32 %v1094, 1.442695
    %v1096 = vpow.pop %v1095
    %v1097 = vadd.f32 %v1096, 1.0
    %v1098 = vrcp.pop %v1097
    %v1099 = vmul.f32 1.0, %v1098
    %v1100 = vtanh.pop %v1093
    %v1101 = vmul.f32 %v1099, %v36
    %1103 = vrot.lane.b32.xlu0 %v1100, 32
    %v1104 = vpop.permute.xlu0 %1103
    %v1106 = vmul.f32 %v1099, %v1104
    %1108 = vrot.lane.b32.xlu0 %v1106, 32
    %v1109 = vpop.permute.xlu0 %1108
    %v1111 = vadd.f32 %v1101, %v1109
    %v1112 = vtanh.pop %v1111
    %1114 = vrot.lane.b32.xlu0 %v1112, 32
    %v1115 = vpop.permute.xlu0 %1114
    %v1117 = vmul.f32 %v1099, %v1115
    %v1118 = vld [vmem:[#allocation3 + $0x60] sm:$0xff]
    %v1119 = vld [vmem:[#allocation3 + $0x68] sm:$0xff]
    %v1120 = vld [vmem:[#allocation3 + $0x70] sm:$0xff]
    %v1121 = vld [vmem:[#allocation3 + $0x78] sm:$0xff]
    %v1122 = vld [vmem:[#allocation3 + $0x80] sm:$0xff]
    %v1123 = vld [vmem:[#allocation3 + $0x88] sm:$0xff]
    %v1124 = vld [vmem:[#allocation3 + $0x90] sm:$0xff]
    %v1125 = vld [vmem:[#allocation3 + $0x98] sm:$0xff]
    %1126 = vrot.lane.b32.xlu0 %v36, 64
    %v1127 = vpop.permute.xlu0 %1126
    %v1128 = vsel %vm58, %v1127, 0
    %1130 = vmatprep.subr.mxu0 0.0
    %v1131 = vand.u32 %v1122, 4294901760
    %1132 = vmatpush1.msra.mxu0 %v1131
    %1133 = vmatprep.subr.mxu0 0.0
    %v1134 = vand.u32 %v1123, 4294901760
    %1135 = vmatpush1.msra.mxu0 %v1134
    %1136 = vmatprep.subr.mxu0 0.0
    %v1137 = vand.u32 %v1124, 4294901760
    %1138 = vmatpush1.msra.mxu0 %v1137
    %1139 = vmatprep.subr.mxu0 0.0
    %v1140 = vand.u32 %v1125, 4294901760
    %1141 = vmatpush1.msra.mxu0 %v1140
    %1142 = vmatprep.subr.mxu0 0.0
    %1143 = vmatpush1.msra.mxu0 0.0
    %1144 = vmatprep.subr.mxu0 0.0
    %1145 = vmatpush1.msra.mxu0 0.0
    %1146 = vmatprep.subr.mxu0 0.0
    %1147 = vmatpush1.msra.mxu0 0.0
    %1148 = vmatprep.subr.mxu0 0.0
    %1149 = vmatpush1.msra.mxu0 0.0
    %1150 = vmatprep.subr.mxu0 0.0
    %1151 = vmatpush1.msra.mxu0 0.0
    %1152 = vmatprep.subr.mxu0 0.0
    %1153 = vmatpush1.msra.mxu0 0.0
    %1154 = vmatprep.subr.mxu0 0.0
    %1155 = vmatpush1.msra.mxu0 0.0
    %1156 = vmatprep.subr.mxu0 0.0
    %1157 = vmatpush1.msra.mxu0 0.0
    %1158 = vmatprep.subr.mxu0 0.0
    %1159 = vmatpush1.msra.mxu0 0.0
    %1160 = vmatprep.subr.mxu0 0.0
    %1161 = vmatpush1.msra.mxu0 0.0
    %1162 = vmatprep.subr.mxu0 0.0
    %1163 = vmatpush1.msra.mxu0 0.0
    %1164 = vmatprep.subr.mxu0 0.0
    %1165 = vmatpush1.msra.mxu0 0.0
    %1166 = vmatprep.subr.mxu0 0.0
    %1167 = vmatpush1.msra.mxu0 0.0
    %1168 = vmatprep.subr.mxu0 0.0
    %1169 = vmatpush1.msra.mxu0 0.0
    %1170 = vmatprep.subr.mxu0 0.0
    %1171 = vmatpush1.msra.mxu0 0.0
    %1172 = vmatprep.subr.mxu0 0.0
    %1173 = vmatpush1.msra.mxu0 0.0
    %1174 = vmatprep.subr.mxu0 0.0
    %1175 = vmatpush1.msra.mxu0 0.0
    %1176 = vmatprep.subr.mxu0 0.0
    %1177 = vmatpush1.msra.mxu0 0.0
    %1178 = vmatprep.subr.mxu0 0.0
    %1179 = vmatpush1.msra.mxu0 0.0
    %1180 = vmatprep.subr.mxu0 0.0
    %1181 = vmatpush1.msra.mxu0 0.0
    %1182 = vmatprep.subr.mxu0 0.0
    %1183 = vmatpush1.msra.mxu0 0.0
    %1184 = vmatprep.subr.mxu0 0.0
    %1185 = vmatpush1.msra.mxu0 0.0
    %1186 = vmatprep.subr.mxu0 0.0
    %1187 = vmatpush1.msra.mxu0 0.0
    %1188 = vmatprep.subr.mxu0 0.0
    %1189 = vmatpush1.msra.mxu0 0.0
    %1190 = vmatprep.subr.mxu0 0.0
    %1191 = vmatpush1.msra.mxu0 0.0
    %1192 = vmatprep.subr.mxu0 0.0
    %1193 = vmatpush1.msra.mxu0 0.0
    %1194 = vmatprep.subr.mxu0 0.0
    %1195 = vmatpush1.msra.mxu0 0.0
    %1196 = vmatprep.subr.mxu0 0.0
    %1197 = vmatpush1.msra.mxu0 0.0
    %1198 = vmatprep.mubr.f32.mxu0 0.0
    %v1199 = vand.u32 %v1128, 4294901760
    %v1200 = vsub.f32 %v1128, %v1199
    %v1201 = vand.u32 %v1200, 4294901760
    %v1202 = vsub.f32 %v1200, %v1201
    %v1203 = vand.u32 %v1202, 4294901760
    %1204 = vmatmul.mubr.f32.gmra.mrb[0].mxu0 %v1203
    %v1205 = vpop.f32.mrb[0].mxu0
    %v1206 = vadd.f32 0.0, %v1205
    %v1207 = vpop.f32.mrb[0].mxu0
    %1208 = vdwg.mxu0
    %1209 = vmatprep.subr.mxu0 0.0
    %v1210 = vand.u32 %v1122, 4294901760
    %v1211 = vsub.f32 %v1122, %v1210
    %v1212 = vand.u32 %v1211, 4294901760
    %v1213 = vsub.f32 %v1211, %v1212
    %v1214 = vand.u32 %v1213, 4294901760
    %1215 = vmatpush1.msra.mxu0 %v1214
    %1216 = vmatprep.subr.mxu0 0.0
    %v1217 = vand.u32 %v1123, 4294901760
    %v1218 = vsub.f32 %v1123, %v1217
    %v1219 = vand.u32 %v1218, 4294901760
    %v1220 = vsub.f32 %v1218, %v1219
    %v1221 = vand.u32 %v1220, 4294901760
    %1222 = vmatpush1.msra.mxu0 %v1221
    %1223 = vmatprep.subr.mxu0 0.0
    %v1224 = vand.u32 %v1124, 4294901760
    %v1225 = vsub.f32 %v1124, %v1224
    %v1226 = vand.u32 %v1225, 4294901760
    %v1227 = vsub.f32 %v1225, %v1226
    %v1228 = vand.u32 %v1227, 4294901760
    %1229 = vmatpush1.msra.mxu0 %v1228
    %1230 = vmatprep.subr.mxu0 0.0
    %v1231 = vand.u32 %v1125, 4294901760
    %v1232 = vsub.f32 %v1125, %v1231
    %v1233 = vand.u32 %v1232, 4294901760
    %v1234 = vsub.f32 %v1232, %v1233
    %v1235 = vand.u32 %v1234, 4294901760
    %1236 = vmatpush1.msra.mxu0 %v1235
    %1237 = vmatprep.subr.mxu0 0.0
    %1238 = vmatpush1.msra.mxu0 0.0
    %1239 = vmatprep.subr.mxu0 0.0
    %1240 = vmatpush1.msra.mxu0 0.0
    %1241 = vmatprep.subr.mxu0 0.0
    %1242 = vmatpush1.msra.mxu0 0.0
    %1243 = vmatprep.subr.mxu0 0.0
    %1244 = vmatpush1.msra.mxu0 0.0
    %1245 = vmatprep.subr.mxu0 0.0
    %1246 = vmatpush1.msra.mxu0 0.0
    %1247 = vmatprep.subr.mxu0 0.0
    %1248 = vmatpush1.msra.mxu0 0.0
    %1249 = vmatprep.subr.mxu0 0.0
    %1250 = vmatpush1.msra.mxu0 0.0
    %1251 = vmatprep.subr.mxu0 0.0
    %1252 = vmatpush1.msra.mxu0 0.0
    %1253 = vmatprep.subr.mxu0 0.0
    %1254 = vmatpush1.msra.mxu0 0.0
    %1255 = vmatprep.subr.mxu0 0.0
    %1256 = vmatpush1.msra.mxu0 0.0
    %1257 = vmatprep.subr.mxu0 0.0
    %1258 = vmatpush1.msra.mxu0 0.0
    %1259 = vmatprep.subr.mxu0 0.0
    %1260 = vmatpush1.msra.mxu0 0.0
    %1261 = vmatprep.subr.mxu0 0.0
    %1262 = vmatpush1.msra.mxu0 0.0
    %1263 = vmatprep.subr.mxu0 0.0
    %1264 = vmatpush1.msra.mxu0 0.0
    %1265 = vmatprep.subr.mxu0 0.0
    %1266 = vmatpush1.msra.mxu0 0.0
    %1267 = vmatprep.subr.mxu0 0.0
    %1268 = vmatpush1.msra.mxu0 0.0
    %1269 = vmatprep.subr.mxu0 0.0
    %1270 = vmatpush1.msra.mxu0 0.0
    %1271 = vmatprep.subr.mxu0 0.0
    %1272 = vmatpush1.msra.mxu0 0.0
    %1273 = vmatprep.subr.mxu0 0.0
    %1274 = vmatpush1.msra.mxu0 0.0
    %1275 = vmatprep.subr.mxu0 0.0
    %1276 = vmatpush1.msra.mxu0 0.0
    %1277 = vmatprep.subr.mxu0 0.0
    %1278 = vmatpush1.msra.mxu0 0.0
    %1279 = vmatprep.subr.mxu0 0.0
    %1280 = vmatpush1.msra.mxu0 0.0
    %1281 = vmatprep.subr.mxu0 0.0
    %1282 = vmatpush1.msra.mxu0 0.0
    %1283 = vmatprep.subr.mxu0 0.0
    %1284 = vmatpush1.msra.mxu0 0.0
    %1285 = vmatprep.subr.mxu0 0.0
    %1286 = vmatpush1.msra.mxu0 0.0
    %1287 = vmatprep.subr.mxu0 0.0
    %1288 = vmatpush1.msra.mxu0 0.0
    %1289 = vmatprep.subr.mxu0 0.0
    %1290 = vmatpush1.msra.mxu0 0.0
    %1291 = vmatprep.subr.mxu0 0.0
    %1292 = vmatpush1.msra.mxu0 0.0
    %1293 = vmatprep.mubr.f32.mxu0 0.0
    %v1294 = vand.u32 %v1128, 4294901760
    %1295 = vmatmul.mubr.f32.gmra.mrb[0].mxu0 %v1294
    %v1296 = vpop.f32.mrb[0].mxu0
    %v1297 = vadd.f32 %v1206, %v1296
    %v1298 = vpop.f32.mrb[0].mxu0
    %1299 = vdwg.mxu0
    %1300 = vmatprep.subr.mxu0 0.0
    %v1301 = vand.u32 %v1122, 4294901760
    %v1302 = vsub.f32 %v1122, %v1301
    %1303 = vmatpush1.msra.mxu0 %v1302
    %1304 = vmatprep.subr.mxu0 0.0
    %v1305 = vand.u32 %v1123, 4294901760
    %v1306 = vsub.f32 %v1123, %v1305
    %1307 = vmatpush1.msra.mxu0 %v1306
    %1308 = vmatprep.subr.mxu0 0.0
    %v1309 = vand.u32 %v1124, 4294901760
    %v1310 = vsub.f32 %v1124, %v1309
    %1311 = vmatpush1.msra.mxu0 %v1310
    %1312 = vmatprep.subr.mxu0 0.0
    %v1313 = vand.u32 %v1125, 4294901760
    %v1314 = vsub.f32 %v1125, %v1313
    %1315 = vmatpush1.msra.mxu0 %v1314
    %1316 = vmatprep.subr.mxu0 0.0
    %1317 = vmatpush1.msra.mxu0 0.0
    %1318 = vmatprep.subr.mxu0 0.0
    %1319 = vmatpush1.msra.mxu0 0.0
    %1320 = vmatprep.subr.mxu0 0.0
    %1321 = vmatpush1.msra.mxu0 0.0
    %1322 = vmatprep.subr.mxu0 0.0
    %1323 = vmatpush1.msra.mxu0 0.0
    %1324 = vmatprep.subr.mxu0 0.0
    %1325 = vmatpush1.msra.mxu0 0.0
    %1326 = vmatprep.subr.mxu0 0.0
    %1327 = vmatpush1.msra.mxu0 0.0
    %1328 = vmatprep.subr.mxu0 0.0
    %1329 = vmatpush1.msra.mxu0 0.0
    %1330 = vmatprep.subr.mxu0 0.0
    %1331 = vmatpush1.msra.mxu0 0.0
    %1332 = vmatprep.subr.mxu0 0.0
    %1333 = vmatpush1.msra.mxu0 0.0
    %1334 = vmatprep.subr.mxu0 0.0
    %1335 = vmatpush1.msra.mxu0 0.0
    %1336 = vmatprep.subr.mxu0 0.0
    %1337 = vmatpush1.msra.mxu0 0.0
    %1338 = vmatprep.subr.mxu0 0.0
    %1339 = vmatpush1.msra.mxu0 0.0
    %1340 = vmatprep.subr.mxu0 0.0
    %1341 = vmatpush1.msra.mxu0 0.0
    %1342 = vmatprep.subr.mxu0 0.0
    %1343 = vmatpush1.msra.mxu0 0.0
    %1344 = vmatprep.subr.mxu0 0.0
    %1345 = vmatpush1.msra.mxu0 0.0
    %1346 = vmatprep.subr.mxu0 0.0
    %1347 = vmatpush1.msra.mxu0 0.0
    %1348 = vmatprep.subr.mxu0 0.0
    %1349 = vmatpush1.msra.mxu0 0.0
    %1350 = vmatprep.subr.mxu0 0.0
    %1351 = vmatpush1.msra.mxu0 0.0
    %1352 = vmatprep.subr.mxu0 0.0
    %1353 = vmatpush1.msra.mxu0 0.0
    %1354 = vmatprep.subr.mxu0 0.0
    %1355 = vmatpush1.msra.mxu0 0.0
    %1356 = vmatprep.subr.mxu0 0.0
    %1357 = vmatpush1.msra.mxu0 0.0
    %1358 = vmatprep.subr.mxu0 0.0
    %1359 = vmatpush1.msra.mxu0 0.0
    %1360 = vmatprep.subr.mxu0 0.0
    %1361 = vmatpush1.msra.mxu0 0.0
    %1362 = vmatprep.subr.mxu0 0.0
    %1363 = vmatpush1.msra.mxu0 0.0
    %1364 = vmatprep.subr.mxu0 0.0
    %1365 = vmatpush1.msra.mxu0 0.0
    %1366 = vmatprep.subr.mxu0 0.0
    %1367 = vmatpush1.msra.mxu0 0.0
    %1368 = vmatprep.subr.mxu0 0.0
    %1369 = vmatpush1.msra.mxu0 0.0
    %1370 = vmatprep.subr.mxu0 0.0
    %1371 = vmatpush1.msra.mxu0 0.0
    %1372 = vmatprep.mubr.f32.mxu0 0.0
    %v1373 = vand.u32 %v1128, 4294901760
    %v1374 = vsub.f32 %v1128, %v1373
    %1375 = vmatmul.mubr.f32.gmra.mrb[0].mxu0 %v1374
    %v1376 = vpop.f32.mrb[0].mxu0
    %v1377 = vadd.f32 %v1297, %v1376
    %v1378 = vpop.f32.mrb[0].mxu0
    %1379 = vdwg.mxu0
    %1380 = vmatprep.subr.mxu0 0.0
    %v1381 = vand.u32 %v1122, 4294901760
    %1382 = vmatpush1.msra.mxu0 %v1381
    %1383 = vmatprep.subr.mxu0 0.0
    %v1384 = vand.u32 %v1123, 4294901760
    %1385 = vmatpush1.msra.mxu0 %v1384
    %1386 = vmatprep.subr.mxu0 0.0
    %v1387 = vand.u32 %v1124, 4294901760
    %1388 = vmatpush1.msra.mxu0 %v1387
    %1389 = vmatprep.subr.mxu0 0.0
    %v1390 = vand.u32 %v1125, 4294901760
    %1391 = vmatpush1.msra.mxu0 %v1390
    %1392 = vmatprep.subr.mxu0 0.0
    %1393 = vmatpush1.msra.mxu0 0.0
    %1394 = vmatprep.subr.mxu0 0.0
    %1395 = vmatpush1.msra.mxu0 0.0
    %1396 = vmatprep.subr.mxu0 0.0
    %1397 = vmatpush1.msra.mxu0 0.0
    %1398 = vmatprep.subr.mxu0 0.0
    %1399 = vmatpush1.msra.mxu0 0.0
    %1400 = vmatprep.subr.mxu0 0.0
    %1401 = vmatpush1.msra.mxu0 0.0
    %1402 = vmatprep.subr.mxu0 0.0
    %1403 = vmatpush1.msra.mxu0 0.0
    %1404 = vmatprep.subr.mxu0 0.0
    %1405 = vmatpush1.msra.mxu0 0.0
    %1406 = vmatprep.subr.mxu0 0.0
    %1407 = vmatpush1.msra.mxu0 0.0
    %1408 = vmatprep.subr.mxu0 0.0
    %1409 = vmatpush1.msra.mxu0 0.0
    %1410 = vmatprep.subr.mxu0 0.0
    %1411 = vmatpush1.msra.mxu0 0.0
    %1412 = vmatprep.subr.mxu0 0.0
    %1413 = vmatpush1.msra.mxu0 0.0
    %1414 = vmatprep.subr.mxu0 0.0
    %1415 = vmatpush1.msra.mxu0 0.0
    %1416 = vmatprep.subr.mxu0 0.0
    %1417 = vmatpush1.msra.mxu0 0.0
    %1418 = vmatprep.subr.mxu0 0.0
    %1419 = vmatpush1.msra.mxu0 0.0
    %1420 = vmatprep.subr.mxu0 0.0
    %1421 = vmatpush1.msra.mxu0 0.0
    %1422 = vmatprep.subr.mxu0 0.0
    %1423 = vmatpush1.msra.mxu0 0.0
    %1424 = vmatprep.subr.mxu0 0.0
    %1425 = vmatpush1.msra.mxu0 0.0
    %1426 = vmatprep.subr.mxu0 0.0
    %1427 = vmatpush1.msra.mxu0 0.0
    %1428 = vmatprep.subr.mxu0 0.0
    %1429 = vmatpush1.msra.mxu0 0.0
    %1430 = vmatprep.subr.mxu0 0.0
    %1431 = vmatpush1.msra.mxu0 0.0
    %1432 = vmatprep.subr.mxu0 0.0
    %1433 = vmatpush1.msra.mxu0 0.0
    %1434 = vmatprep.subr.mxu0 0.0
    %1435 = vmatpush1.msra.mxu0 0.0
    %1436 = vmatprep.subr.mxu0 0.0
    %1437 = vmatpush1.msra.mxu0 0.0
    %1438 = vmatprep.subr.mxu0 0.0
    %1439 = vmatpush1.msra.mxu0 0.0
    %1440 = vmatprep.subr.mxu0 0.0
    %1441 = vmatpush1.msra.mxu0 0.0
    %1442 = vmatprep.subr.mxu0 0.0
    %1443 = vmatpush1.msra.mxu0 0.0
    %1444 = vmatprep.subr.mxu0 0.0
    %1445 = vmatpush1.msra.mxu0 0.0
    %1446 = vmatprep.subr.mxu0 0.0
    %1447 = vmatpush1.msra.mxu0 0.0
    %1448 = vmatprep.mubr.f32.mxu0 0.0
    %v1449 = vand.u32 %v1128, 4294901760
    %v1450 = vsub.f32 %v1128, %v1449
    %v1451 = vand.u32 %v1450, 4294901760
    %1452 = vmatmul.mubr.f32.gmra.mrb[0].mxu0 %v1451
    %v1453 = vpop.f32.mrb[0].mxu0
    %v1454 = vadd.f32 %v1377, %v1453
    %v1455 = vpop.f32.mrb[0].mxu0
    %1456 = vdwg.mxu0
    %1457 = vmatprep.subr.mxu0 0.0
    %v1458 = vand.u32 %v1122, 4294901760
    %v1459 = vsub.f32 %v1122, %v1458
    %v1460 = vand.u32 %v1459, 4294901760
    %1461 = vmatpush1.msra.mxu0 %v1460
    %1462 = vmatprep.subr.mxu0 0.0
    %v1463 = vand.u32 %v1123, 4294901760
    %v1464 = vsub.f32 %v1123, %v1463
    %v1465 = vand.u32 %v1464, 4294901760
    %1466 = vmatpush1.msra.mxu0 %v1465
    %1467 = vmatprep.subr.mxu0 0.0
    %v1468 = vand.u32 %v1124, 4294901760
    %v1469 = vsub.f32 %v1124, %v1468
    %v1470 = vand.u32 %v1469, 4294901760
    %1471 = vmatpush1.msra.mxu0 %v1470
    %1472 = vmatprep.subr.mxu0 0.0
    %v1473 = vand.u32 %v1125, 4294901760
    %v1474 = vsub.f32 %v1125, %v1473
    %v1475 = vand.u32 %v1474, 4294901760
    %1476 = vmatpush1.msra.mxu0 %v1475
    %1477 = vmatprep.subr.mxu0 0.0
    %1478 = vmatpush1.msra.mxu0 0.0
    %1479 = vmatprep.subr.mxu0 0.0
    %1480 = vmatpush1.msra.mxu0 0.0
    %1481 = vmatprep.subr.mxu0 0.0
    %1482 = vmatpush1.msra.mxu0 0.0
    %1483 = vmatprep.subr.mxu0 0.0
    %1484 = vmatpush1.msra.mxu0 0.0
    %1485 = vmatprep.subr.mxu0 0.0
    %1486 = vmatpush1.msra.mxu0 0.0
    %1487 = vmatprep.subr.mxu0 0.0
    %1488 = vmatpush1.msra.mxu0 0.0
    %1489 = vmatprep.subr.mxu0 0.0
    %1490 = vmatpush1.msra.mxu0 0.0
    %1491 = vmatprep.subr.mxu0 0.0
    %1492 = vmatpush1.msra.mxu0 0.0
    %1493 = vmatprep.subr.mxu0 0.0
    %1494 = vmatpush1.msra.mxu0 0.0
    %1495 = vmatprep.subr.mxu0 0.0
    %1496 = vmatpush1.msra.mxu0 0.0
    %1497 = vmatprep.subr.mxu0 0.0
    %1498 = vmatpush1.msra.mxu0 0.0
    %1499 = vmatprep.subr.mxu0 0.0
    %1500 = vmatpush1.msra.mxu0 0.0
    %1501 = vmatprep.subr.mxu0 0.0
    %1502 = vmatpush1.msra.mxu0 0.0
    %1503 = vmatprep.subr.mxu0 0.0
    %1504 = vmatpush1.msra.mxu0 0.0
    %1505 = vmatprep.subr.mxu0 0.0
    %1506 = vmatpush1.msra.mxu0 0.0
    %1507 = vmatprep.subr.mxu0 0.0
    %1508 = vmatpush1.msra.mxu0 0.0
    %1509 = vmatprep.subr.mxu0 0.0
    %1510 = vmatpush1.msra.mxu0 0.0
    %1511 = vmatprep.subr.mxu0 0.0
    %1512 = vmatpush1.msra.mxu0 0.0
    %1513 = vmatprep.subr.mxu0 0.0
    %1514 = vmatpush1.msra.mxu0 0.0
    %1515 = vmatprep.subr.mxu0 0.0
    %1516 = vmatpush1.msra.mxu0 0.0
    %1517 = vmatprep.subr.mxu0 0.0
    %1518 = vmatpush1.msra.mxu0 0.0
    %1519 = vmatprep.subr.mxu0 0.0
    %1520 = vmatpush1.msra.mxu0 0.0
    %1521 = vmatprep.subr.mxu0 0.0
    %1522 = vmatpush1.msra.mxu0 0.0
    %1523 = vmatprep.subr.mxu0 0.0
    %1524 = vmatpush1.msra.mxu0 0.0
    %1525 = vmatprep.subr.mxu0 0.0
    %1526 = vmatpush1.msra.mxu0 0.0
    %1527 = vmatprep.subr.mxu0 0.0
    %1528 = vmatpush1.msra.mxu0 0.0
    %1529 = vmatprep.subr.mxu0 0.0
    %1530 = vmatpush1.msra.mxu0 0.0
    %1531 = vmatprep.subr.mxu0 0.0
    %1532 = vmatpush1.msra.mxu0 0.0
    %1533 = vmatprep.mubr.f32.mxu0 0.0
    %v1534 = vand.u32 %v1128, 4294901760
    %1535 = vmatmul.mubr.f32.gmra.mrb[0].mxu0 %v1534
    %v1536 = vpop.f32.mrb[0].mxu0
    %v1537 = vadd.f32 %v1454, %v1536
    %v1538 = vpop.f32.mrb[0].mxu0
    %1539 = vdwg.mxu0
    %1540 = vmatprep.subr.mxu0 0.0
    %v1541 = vand.u32 %v1122, 4294901760
    %1542 = vmatpush1.msra.mxu0 %v1541
    %1543 = vmatprep.subr.mxu0 0.0
    %v1544 = vand.u32 %v1123, 4294901760
    %1545 = vmatpush1.msra.mxu0 %v1544
    %1546 = vmatprep.subr.mxu0 0.0
    %v1547 = vand.u32 %v1124, 4294901760
    %1548 = vmatpush1.msra.mxu0 %v1547
    %1549 = vmatprep.subr.mxu0 0.0
    %v1550 = vand.u32 %v1125, 4294901760
    %1551 = vmatpush1.msra.mxu0 %v1550
    %1552 = vmatprep.subr.mxu0 0.0
    %1553 = vmatpush1.msra.mxu0 0.0
    %1554 = vmatprep.subr.mxu0 0.0
    %1555 = vmatpush1.msra.mxu0 0.0
    %1556 = vmatprep.subr.mxu0 0.0
    %1557 = vmatpush1.msra.mxu0 0.0
    %1558 = vmatprep.subr.mxu0 0.0
    %1559 = vmatpush1.msra.mxu0 0.0
    %1560 = vmatprep.subr.mxu0 0.0
    %1561 = vmatpush1.msra.mxu0 0.0
    %1562 = vmatprep.subr.mxu0 0.0
    %1563 = vmatpush1.msra.mxu0 0.0
    %1564 = vmatprep.subr.mxu0 0.0
    %1565 = vmatpush1.msra.mxu0 0.0
    %1566 = vmatprep.subr.mxu0 0.0
    %1567 = vmatpush1.msra.mxu0 0.0
    %1568 = vmatprep.subr.mxu0 0.0
    %1569 = vmatpush1.msra.mxu0 0.0
    %1570 = vmatprep.subr.mxu0 0.0
    %1571 = vmatpush1.msra.mxu0 0.0
    %1572 = vmatprep.subr.mxu0 0.0
    %1573 = vmatpush1.msra.mxu0 0.0
    %1574 = vmatprep.subr.mxu0 0.0
    %1575 = vmatpush1.msra.mxu0 0.0
    %1576 = vmatprep.subr.mxu0 0.0
    %1577 = vmatpush1.msra.mxu0 0.0
    %1578 = vmatprep.subr.mxu0 0.0
    %1579 = vmatpush1.msra.mxu0 0.0
    %1580 = vmatprep.subr.mxu0 0.0
    %1581 = vmatpush1.msra.mxu0 0.0
    %1582 = vmatprep.subr.mxu0 0.0
    %1583 = vmatpush1.msra.mxu0 0.0
    %1584 = vmatprep.subr.mxu0 0.0
    %1585 = vmatpush1.msra.mxu0 0.0
    %1586 = vmatprep.subr.mxu0 0.0
    %1587 = vmatpush1.msra.mxu0 0.0
    %1588 = vmatprep.subr.mxu0 0.0
    %1589 = vmatpush1.msra.mxu0 0.0
    %1590 = vmatprep.subr.mxu0 0.0
    %1591 = vmatpush1.msra.mxu0 0.0
    %1592 = vmatprep.subr.mxu0 0.0
    %1593 = vmatpush1.msra.mxu0 0.0
    %1594 = vmatprep.subr.mxu0 0.0
    %1595 = vmatpush1.msra.mxu0 0.0
    %1596 = vmatprep.subr.mxu0 0.0
    %1597 = vmatpush1.msra.mxu0 0.0
    %1598 = vmatprep.subr.mxu0 0.0
    %1599 = vmatpush1.msra.mxu0 0.0
    %1600 = vmatprep.subr.mxu0 0.0
    %1601 = vmatpush1.msra.mxu0 0.0
    %1602 = vmatprep.subr.mxu0 0.0
    %1603 = vmatpush1.msra.mxu0 0.0
    %1604 = vmatprep.subr.mxu0 0.0
    %1605 = vmatpush1.msra.mxu0 0.0
    %1606 = vmatprep.subr.mxu0 0.0
    %1607 = vmatpush1.msra.mxu0 0.0
    %1608 = vmatprep.mubr.f32.mxu0 0.0
    %v1609 = vand.u32 %v1128, 4294901760
    %1610 = vmatmul.mubr.f32.gmra.mrb[0].mxu0 %v1609
    %v1611 = vpop.f32.mrb[0].mxu0
    %v1612 = vadd.f32 %v1537, %v1611
    %v1613 = vpop.f32.mrb[0].mxu0
    %1614 = vdwg.mxu0
    %1616 = vrot.lane.b32.xlu0 %v1117, 64
    %v1617 = vpop.permute.xlu0 %1616
    %v1618 = vsel %vm58, %v1617, 0
    %1620 = vmatprep.subr.mxu0 0.0
    %v1621 = vand.u32 %v1118, 4294901760
    %1622 = vmatpush1.msra.mxu0 %v1621
    %1623 = vmatprep.subr.mxu0 0.0
    %v1624 = vand.u32 %v1119, 4294901760
    %1625 = vmatpush1.msra.mxu0 %v1624
    %1626 = vmatprep.subr.mxu0 0.0
    %v1627 = vand.u32 %v1120, 4294901760
    %1628 = vmatpush1.msra.mxu0 %v1627
    %1629 = vmatprep.subr.mxu0 0.0
    %v1630 = vand.u32 %v1121, 4294901760
    %1631 = vmatpush1.msra.mxu0 %v1630
    %1632 = vmatprep.subr.mxu0 0.0
    %1633 = vmatpush1.msra.mxu0 0.0
    %1634 = vmatprep.subr.mxu0 0.0
    %1635 = vmatpush1.msra.mxu0 0.0
    %1636 = vmatprep.subr.mxu0 0.0
    %1637 = vmatpush1.msra.mxu0 0.0
    %1638 = vmatprep.subr.mxu0 0.0
    %1639 = vmatpush1.msra.mxu0 0.0
    %1640 = vmatprep.subr.mxu0 0.0
    %1641 = vmatpush1.msra.mxu0 0.0
    %1642 = vmatprep.subr.mxu0 0.0
    %1643 = vmatpush1.msra.mxu0 0.0
    %1644 = vmatprep.subr.mxu0 0.0
    %1645 = vmatpush1.msra.mxu0 0.0
    %1646 = vmatprep.subr.mxu0 0.0
    %1647 = vmatpush1.msra.mxu0 0.0
    %1648 = vmatprep.subr.mxu0 0.0
    %1649 = vmatpush1.msra.mxu0 0.0
    %1650 = vmatprep.subr.mxu0 0.0
    %1651 = vmatpush1.msra.mxu0 0.0
    %1652 = vmatprep.subr.mxu0 0.0
    %1653 = vmatpush1.msra.mxu0 0.0
    %1654 = vmatprep.subr.mxu0 0.0
    %1655 = vmatpush1.msra.mxu0 0.0
    %1656 = vmatprep.subr.mxu0 0.0
    %1657 = vmatpush1.msra.mxu0 0.0
    %1658 = vmatprep.subr.mxu0 0.0
    %1659 = vmatpush1.msra.mxu0 0.0
    %1660 = vmatprep.subr.mxu0 0.0
    %1661 = vmatpush1.msra.mxu0 0.0
    %1662 = vmatprep.subr.mxu0 0.0
    %1663 = vmatpush1.msra.mxu0 0.0
    %1664 = vmatprep.subr.mxu0 0.0
    %1665 = vmatpush1.msra.mxu0 0.0
    %1666 = vmatprep.subr.mxu0 0.0
    %1667 = vmatpush1.msra.mxu0 0.0
    %1668 = vmatprep.subr.mxu0 0.0
    %1669 = vmatpush1.msra.mxu0 0.0
    %1670 = vmatprep.subr.mxu0 0.0
    %1671 = vmatpush1.msra.mxu0 0.0
    %1672 = vmatprep.subr.mxu0 0.0
    %1673 = vmatpush1.msra.mxu0 0.0
    %1674 = vmatprep.subr.mxu0 0.0
    %1675 = vmatpush1.msra.mxu0 0.0
    %1676 = vmatprep.subr.mxu0 0.0
    %1677 = vmatpush1.msra.mxu0 0.0
    %1678 = vmatprep.subr.mxu0 0.0
    %1679 = vmatpush1.msra.mxu0 0.0
    %1680 = vmatprep.subr.mxu0 0.0
    %1681 = vmatpush1.msra.mxu0 0.0
    %1682 = vmatprep.subr.mxu0 0.0
    %1683 = vmatpush1.msra.mxu0 0.0
    %1684 = vmatprep.subr.mxu0 0.0
    %1685 = vmatpush1.msra.mxu0 0.0
    %1686 = vmatprep.subr.mxu0 0.0
    %1687 = vmatpush1.msra.mxu0 0.0
    %1688 = vmatprep.mubr.f32.mxu0 0.0
    %v1689 = vand.u32 %v1618, 4294901760
    %v1690 = vsub.f32 %v1618, %v1689
    %v1691 = vand.u32 %v1690, 4294901760
    %v1692 = vsub.f32 %v1690, %v1691
    %v1693 = vand.u32 %v1692, 4294901760
    %1694 = vmatmul.mubr.f32.gmra.mrb[0].mxu0 %v1693
    %v1695 = vpop.f32.mrb[0].mxu0
    %v1696 = vadd.f32 %v1612, %v1695
    %v1697 = vpop.f32.mrb[0].mxu0
    %1698 = vdwg.mxu0
    %1699 = vmatprep.subr.mxu0 0.0
    %v1700 = vand.u32 %v1118, 4294901760
    %v1701 = vsub.f32 %v1118, %v1700
    %v1702 = vand.u32 %v1701, 4294901760
    %v1703 = vsub.f32 %v1701, %v1702
    %v1704 = vand.u32 %v1703, 4294901760
    %1705 = vmatpush1.msra.mxu0 %v1704
    %1706 = vmatprep.subr.mxu0 0.0
    %v1707 = vand.u32 %v1119, 4294901760
    %v1708 = vsub.f32 %v1119, %v1707
    %v1709 = vand.u32 %v1708, 4294901760
    %v1710 = vsub.f32 %v1708, %v1709
    %v1711 = vand.u32 %v1710, 4294901760
    %1712 = vmatpush1.msra.mxu0 %v1711
    %1713 = vmatprep.subr.mxu0 0.0
    %v1714 = vand.u32 %v1120, 4294901760
    %v1715 = vsub.f32 %v1120, %v1714
    %v1716 = vand.u32 %v1715, 4294901760
    %v1717 = vsub.f32 %v1715, %v1716
    %v1718 = vand.u32 %v1717, 4294901760
    %1719 = vmatpush1.msra.mxu0 %v1718
    %1720 = vmatprep.subr.mxu0 0.0
    %v1721 = vand.u32 %v1121, 4294901760
    %v1722 = vsub.f32 %v1121, %v1721
    %v1723 = vand.u32 %v1722, 4294901760
    %v1724 = vsub.f32 %v1722, %v1723
    %v1725 = vand.u32 %v1724, 4294901760
    %1726 = vmatpush1.msra.mxu0 %v1725
    %1727 = vmatprep.subr.mxu0 0.0
    %1728 = vmatpush1.msra.mxu0 0.0
    %1729 = vmatprep.subr.mxu0 0.0
    %1730 = vmatpush1.msra.mxu0 0.0
    %1731 = vmatprep.subr.mxu0 0.0
    %1732 = vmatpush1.msra.mxu0 0.0
    %1733 = vmatprep.subr.mxu0 0.0
    %1734 = vmatpush1.msra.mxu0 0.0
    %1735 = vmatprep.subr.mxu0 0.0
    %1736 = vmatpush1.msra.mxu0 0.0
    %1737 = vmatprep.subr.mxu0 0.0
    %1738 = vmatpush1.msra.mxu0 0.0
    %1739 = vmatprep.subr.mxu0 0.0
    %1740 = vmatpush1.msra.mxu0 0.0
    %1741 = vmatprep.subr.mxu0 0.0
    %1742 = vmatpush1.msra.mxu0 0.0
    %1743 = vmatprep.subr.mxu0 0.0
    %1744 = vmatpush1.msra.mxu0 0.0
    %1745 = vmatprep.subr.mxu0 0.0
    %1746 = vmatpush1.msra.mxu0 0.0
    %1747 = vmatprep.subr.mxu0 0.0
    %1748 = vmatpush1.msra.mxu0 0.0
    %1749 = vmatprep.subr.mxu0 0.0
    %1750 = vmatpush1.msra.mxu0 0.0
    %1751 = vmatprep.subr.mxu0 0.0
    %1752 = vmatpush1.msra.mxu0 0.0
    %1753 = vmatprep.subr.mxu0 0.0
    %1754 = vmatpush1.msra.mxu0 0.0
    %1755 = vmatprep.subr.mxu0 0.0
    %1756 = vmatpush1.msra.mxu0 0.0
    %1757 = vmatprep.subr.mxu0 0.0
    %1758 = vmatpush1.msra.mxu0 0.0
    %1759 = vmatprep.subr.mxu0 0.0
    %1760 = vmatpush1.msra.mxu0 0.0
    %1761 = vmatprep.subr.mxu0 0.0
    %1762 = vmatpush1.msra.mxu0 0.0
    %1763 = vmatprep.subr.mxu0 0.0
    %1764 = vmatpush1.msra.mxu0 0.0
    %1765 = vmatprep.subr.mxu0 0.0
    %1766 = vmatpush1.msra.mxu0 0.0
    %1767 = vmatprep.subr.mxu0 0.0
    %1768 = vmatpush1.msra.mxu0 0.0
    %1769 = vmatprep.subr.mxu0 0.0
    %1770 = vmatpush1.msra.mxu0 0.0
    %1771 = vmatprep.subr.mxu0 0.0
    %1772 = vmatpush1.msra.mxu0 0.0
    %1773 = vmatprep.subr.mxu0 0.0
    %1774 = vmatpush1.msra.mxu0 0.0
    %1775 = vmatprep.subr.mxu0 0.0
    %1776 = vmatpush1.msra.mxu0 0.0
    %1777 = vmatprep.subr.mxu0 0.0
    %1778 = vmatpush1.msra.mxu0 0.0
    %1779 = vmatprep.subr.mxu0 0.0
    %1780 = vmatpush1.msra.mxu0 0.0
    %1781 = vmatprep.subr.mxu0 0.0
    %1782 = vmatpush1.msra.mxu0 0.0
    %1783 = vmatprep.mubr.f32.mxu0 0.0
    %v1784 = vand.u32 %v1618, 4294901760
    %1785 = vmatmul.mubr.f32.gmra.mrb[0].mxu0 %v1784
    %v1786 = vpop.f32.mrb[0].mxu0
    %v1787 = vadd.f32 %v1696, %v1786
    %v1788 = vpop.f32.mrb[0].mxu0
    %1789 = vdwg.mxu0
    %1790 = vmatprep.subr.mxu0 0.0
    %v1791 = vand.u32 %v1118, 4294901760
    %v1792 = vsub.f32 %v1118, %v1791
    %1793 = vmatpush1.msra.mxu0 %v1792
    %1794 = vmatprep.subr.mxu0 0.0
    %v1795 = vand.u32 %v1119, 4294901760
    %v1796 = vsub.f32 %v1119, %v1795
    %1797 = vmatpush1.msra.mxu0 %v1796
    %1798 = vmatprep.subr.mxu0 0.0
    %v1799 = vand.u32 %v1120, 4294901760
    %v1800 = vsub.f32 %v1120, %v1799
    %1801 = vmatpush1.msra.mxu0 %v1800
    %1802 = vmatprep.subr.mxu0 0.0
    %v1803 = vand.u32 %v1121, 4294901760
    %v1804 = vsub.f32 %v1121, %v1803
    %1805 = vmatpush1.msra.mxu0 %v1804
    %1806 = vmatprep.subr.mxu0 0.0
    %1807 = vmatpush1.msra.mxu0 0.0
    %1808 = vmatprep.subr.mxu0 0.0
    %1809 = vmatpush1.msra.mxu0 0.0
    %1810 = vmatprep.subr.mxu0 0.0
    %1811 = vmatpush1.msra.mxu0 0.0
    %1812 = vmatprep.subr.mxu0 0.0
    %1813 = vmatpush1.msra.mxu0 0.0
    %1814 = vmatprep.subr.mxu0 0.0
    %1815 = vmatpush1.msra.mxu0 0.0
    %1816 = vmatprep.subr.mxu0 0.0
    %1817 = vmatpush1.msra.mxu0 0.0
    %1818 = vmatprep.subr.mxu0 0.0
    %1819 = vmatpush1.msra.mxu0 0.0
    %1820 = vmatprep.subr.mxu0 0.0
    %1821 = vmatpush1.msra.mxu0 0.0
    %1822 = vmatprep.subr.mxu0 0.0
    %1823 = vmatpush1.msra.mxu0 0.0
    %1824 = vmatprep.subr.mxu0 0.0
    %1825 = vmatpush1.msra.mxu0 0.0
    %1826 = vmatprep.subr.mxu0 0.0
    %1827 = vmatpush1.msra.mxu0 0.0
    %1828 = vmatprep.subr.mxu0 0.0
    %1829 = vmatpush1.msra.mxu0 0.0
    %1830 = vmatprep.subr.mxu0 0.0
    %1831 = vmatpush1.msra.mxu0 0.0
    %1832 = vmatprep.subr.mxu0 0.0
    %1833 = vmatpush1.msra.mxu0 0.0
    %1834 = vmatprep.subr.mxu0 0.0
    %1835 = vmatpush1.msra.mxu0 0.0
    %1836 = vmatprep.subr.mxu0 0.0
    %1837 = vmatpush1.msra.mxu0 0.0
    %1838 = vmatprep.subr.mxu0 0.0
    %1839 = vmatpush1.msra.mxu0 0.0
    %1840 = vmatprep.subr.mxu0 0.0
    %1841 = vmatpush1.msra.mxu0 0.0
    %1842 = vmatprep.subr.mxu0 0.0
    %1843 = vmatpush1.msra.mxu0 0.0
    %1844 = vmatprep.subr.mxu0 0.0
    %1845 = vmatpush1.msra.mxu0 0.0
    %1846 = vmatprep.subr.mxu0 0.0
    %1847 = vmatpush1.msra.mxu0 0.0
    %1848 = vmatprep.subr.mxu0 0.0
    %1849 = vmatpush1.msra.mxu0 0.0
    %1850 = vmatprep.subr.mxu0 0.0
    %1851 = vmatpush1.msra.mxu0 0.0
    %1852 = vmatprep.subr.mxu0 0.0
    %1853 = vmatpush1.msra.mxu0 0.0
    %1854 = vmatprep.subr.mxu0 0.0
    %1855 = vmatpush1.msra.mxu0 0.0
    %1856 = vmatprep.subr.mxu0 0.0
    %1857 = vmatpush1.msra.mxu0 0.0
    %1858 = vmatprep.subr.mxu0 0.0
    %1859 = vmatpush1.msra.mxu0 0.0
    %1860 = vmatprep.subr.mxu0 0.0
    %1861 = vmatpush1.msra.mxu0 0.0
    %1862 = vmatprep.mubr.f32.mxu0 0.0
    %v1863 = vand.u32 %v1618, 4294901760
    %v1864 = vsub.f32 %v1618, %v1863
    %1865 = vmatmul.mubr.f32.gmra.mrb[0].mxu0 %v1864
    %v1866 = vpop.f32.mrb[0].mxu0
    %v1867 = vadd.f32 %v1787, %v1866
    %v1868 = vpop.f32.mrb[0].mxu0
    %1869 = vdwg.mxu0
    %1870 = vmatprep.subr.mxu0 0.0
    %v1871 = vand.u32 %v1118, 4294901760
    %1872 = vmatpush1.msra.mxu0 %v1871
    %1873 = vmatprep.subr.mxu0 0.0
    %v1874 = vand.u32 %v1119, 4294901760
    %1875 = vmatpush1.msra.mxu0 %v1874
    %1876 = vmatprep.subr.mxu0 0.0
    %v1877 = vand.u32 %v1120, 4294901760
    %1878 = vmatpush1.msra.mxu0 %v1877
    %1879 = vmatprep.subr.mxu0 0.0
    %v1880 = vand.u32 %v1121, 4294901760
    %1881 = vmatpush1.msra.mxu0 %v1880
    %1882 = vmatprep.subr.mxu0 0.0
    %1883 = vmatpush1.msra.mxu0 0.0
    %1884 = vmatprep.subr.mxu0 0.0
    %1885 = vmatpush1.msra.mxu0 0.0
    %1886 = vmatprep.subr.mxu0 0.0
    %1887 = vmatpush1.msra.mxu0 0.0
    %1888 = vmatprep.subr.mxu0 0.0
    %1889 = vmatpush1.msra.mxu0 0.0
    %1890 = vmatprep.subr.mxu0 0.0
    %1891 = vmatpush1.msra.mxu0 0.0
    %1892 = vmatprep.subr.mxu0 0.0
    %1893 = vmatpush1.msra.mxu0 0.0
    %1894 = vmatprep.subr.mxu0 0.0
    %1895 = vmatpush1.msra.mxu0 0.0
    %1896 = vmatprep.subr.mxu0 0.0
    %1897 = vmatpush1.msra.mxu0 0.0
    %1898 = vmatprep.subr.mxu0 0.0
    %1899 = vmatpush1.msra.mxu0 0.0
    %1900 = vmatprep.subr.mxu0 0.0
    %1901 = vmatpush1.msra.mxu0 0.0
    %1902 = vmatprep.subr.mxu0 0.0
    %1903 = vmatpush1.msra.mxu0 0.0
    %1904 = vmatprep.subr.mxu0 0.0
    %1905 = vmatpush1.msra.mxu0 0.0
    %1906 = vmatprep.subr.mxu0 0.0
    %1907 = vmatpush1.msra.mxu0 0.0
    %1908 = vmatprep.subr.mxu0 0.0
    %1909 = vmatpush1.msra.mxu0 0.0
    %1910 = vmatprep.subr.mxu0 0.0
    %1911 = vmatpush1.msra.mxu0 0.0
    %1912 = vmatprep.subr.mxu0 0.0
    %1913 = vmatpush1.msra.mxu0 0.0
    %1914 = vmatprep.subr.mxu0 0.0
    %1915 = vmatpush1.msra.mxu0 0.0
    %1916 = vmatprep.subr.mxu0 0.0
    %1917 = vmatpush1.msra.mxu0 0.0
    %1918 = vmatprep.subr.mxu0 0.0
    %1919 = vmatpush1.msra.mxu0 0.0
    %1920 = vmatprep.subr.mxu0 0.0
    %1921 = vmatpush1.msra.mxu0 0.0
    %1922 = vmatprep.subr.mxu0 0.0
    %1923 = vmatpush1.msra.mxu0 0.0
    %1924 = vmatprep.subr.mxu0 0.0
    %1925 = vmatpush1.msra.mxu0 0.0
    %1926 = vmatprep.subr.mxu0 0.0
    %1927 = vmatpush1.msra.mxu0 0.0
    %1928 = vmatprep.subr.mxu0 0.0
    %1929 = vmatpush1.msra.mxu0 0.0
    %1930 = vmatprep.subr.mxu0 0.0
    %1931 = vmatpush1.msra.mxu0 0.0
    %1932 = vmatprep.subr.mxu0 0.0
    %1933 = vmatpush1.msra.mxu0 0.0
    %1934 = vmatprep.subr.mxu0 0.0
    %1935 = vmatpush1.msra.mxu0 0.0
    %1936 = vmatprep.subr.mxu0 0.0
    %1937 = vmatpush1.msra.mxu0 0.0
    %1938 = vmatprep.mubr.f32.mxu0 0.0
    %v1939 = vand.u32 %v1618, 4294901760
    %v1940 = vsub.f32 %v1618, %v1939
    %v1941 = vand.u32 %v1940, 4294901760
    %1942 = vmatmul.mubr.f32.gmra.mrb[0].mxu0 %v1941
    %v1943 = vpop.f32.mrb[0].mxu0
    %v1944 = vadd.f32 %v1867, %v1943
    %v1945 = vpop.f32.mrb[0].mxu0
    %1946 = vdwg.mxu0
    %1947 = vmatprep.subr.mxu0 0.0
    %v1948 = vand.u32 %v1118, 4294901760
    %v1949 = vsub.f32 %v1118, %v1948
    %v1950 = vand.u32 %v1949, 4294901760
    %1951 = vmatpush1.msra.mxu0 %v1950
    %1952 = vmatprep.subr.mxu0 0.0
    %v1953 = vand.u32 %v1119, 4294901760
    %v1954 = vsub.f32 %v1119, %v1953
    %v1955 = vand.u32 %v1954, 4294901760
    %1956 = vmatpush1.msra.mxu0 %v1955
    %1957 = vmatprep.subr.mxu0 0.0
    %v1958 = vand.u32 %v1120, 4294901760
    %v1959 = vsub.f32 %v1120, %v1958
    %v1960 = vand.u32 %v1959, 4294901760
    %1961 = vmatpush1.msra.mxu0 %v1960
    %1962 = vmatprep.subr.mxu0 0.0
    %v1963 = vand.u32 %v1121, 4294901760
    %v1964 = vsub.f32 %v1121, %v1963
    %v1965 = vand.u32 %v1964, 4294901760
    %1966 = vmatpush1.msra.mxu0 %v1965
    %1967 = vmatprep.subr.mxu0 0.0
    %1968 = vmatpush1.msra.mxu0 0.0
    %1969 = vmatprep.subr.mxu0 0.0
    %1970 = vmatpush1.msra.mxu0 0.0
    %1971 = vmatprep.subr.mxu0 0.0
    %1972 = vmatpush1.msra.mxu0 0.0
    %1973 = vmatprep.subr.mxu0 0.0
    %1974 = vmatpush1.msra.mxu0 0.0
    %1975 = vmatprep.subr.mxu0 0.0
    %1976 = vmatpush1.msra.mxu0 0.0
    %1977 = vmatprep.subr.mxu0 0.0
    %1978 = vmatpush1.msra.mxu0 0.0
    %1979 = vmatprep.subr.mxu0 0.0
    %1980 = vmatpush1.msra.mxu0 0.0
    %1981 = vmatprep.subr.mxu0 0.0
    %1982 = vmatpush1.msra.mxu0 0.0
    %1983 = vmatprep.subr.mxu0 0.0
    %1984 = vmatpush1.msra.mxu0 0.0
    %1985 = vmatprep.subr.mxu0 0.0
    %1986 = vmatpush1.msra.mxu0 0.0
    %1987 = vmatprep.subr.mxu0 0.0
    %1988 = vmatpush1.msra.mxu0 0.0
    %1989 = vmatprep.subr.mxu0 0.0
    %1990 = vmatpush1.msra.mxu0 0.0
    %1991 = vmatprep.subr.mxu0 0.0
    %1992 = vmatpush1.msra.mxu0 0.0
    %1993 = vmatprep.subr.mxu0 0.0
    %1994 = vmatpush1.msra.mxu0 0.0
    %1995 = vmatprep.subr.mxu0 0.0
    %1996 = vmatpush1.msra.mxu0 0.0
    %1997 = vmatprep.subr.mxu0 0.0
    %1998 = vmatpush1.msra.mxu0 0.0
    %1999 = vmatprep.subr.mxu0 0.0
    %2000 = vmatpush1.msra.mxu0 0.0
    %2001 = vmatprep.subr.mxu0 0.0
    %2002 = vmatpush1.msra.mxu0 0.0
    %2003 = vmatprep.subr.mxu0 0.0
    %2004 = vmatpush1.msra.mxu0 0.0
    %2005 = vmatprep.subr.mxu0 0.0
    %2006 = vmatpush1.msra.mxu0 0.0
    %2007 = vmatprep.subr.mxu0 0.0
    %2008 = vmatpush1.msra.mxu0 0.0
    %2009 = vmatprep.subr.mxu0 0.0
    %2010 = vmatpush1.msra.mxu0 0.0
    %2011 = vmatprep.subr.mxu0 0.0
    %2012 = vmatpush1.msra.mxu0 0.0
    %2013 = vmatprep.subr.mxu0 0.0
    %2014 = vmatpush1.msra.mxu0 0.0
    %2015 = vmatprep.subr.mxu0 0.0
    %2016 = vmatpush1.msra.mxu0 0.0
    %2017 = vmatprep.subr.mxu0 0.0
    %2018 = vmatpush1.msra.mxu0 0.0
    %2019 = vmatprep.subr.mxu0 0.0
    %2020 = vmatpush1.msra.mxu0 0.0
    %2021 = vmatprep.subr.mxu0 0.0
    %2022 = vmatpush1.msra.mxu0 0.0
    %2023 = vmatprep.mubr.f32.mxu0 0.0
    %v2024 = vand.u32 %v1618, 4294901760
    %2025 = vmatmul.mubr.f32.gmra.mrb[0].mxu0 %v2024
    %v2026 = vpop.f32.mrb[0].mxu0
    %v2027 = vadd.f32 %v1944, %v2026
    %v2028 = vpop.f32.mrb[0].mxu0
    %2029 = vdwg.mxu0
    %2030 = vmatprep.subr.mxu0 0.0
    %v2031 = vand.u32 %v1118, 4294901760
    %2032 = vmatpush1.msra.mxu0 %v2031
    %2033 = vmatprep.subr.mxu0 0.0
    %v2034 = vand.u32 %v1119, 4294901760
    %2035 = vmatpush1.msra.mxu0 %v2034
    %2036 = vmatprep.subr.mxu0 0.0
    %v2037 = vand.u32 %v1120, 4294901760
    %2038 = vmatpush1.msra.mxu0 %v2037
    %2039 = vmatprep.subr.mxu0 0.0
    %v2040 = vand.u32 %v1121, 4294901760
    %2041 = vmatpush1.msra.mxu0 %v2040
    %2042 = vmatprep.subr.mxu0 0.0
    %2043 = vmatpush1.msra.mxu0 0.0
    %2044 = vmatprep.subr.mxu0 0.0
    %2045 = vmatpush1.msra.mxu0 0.0
    %2046 = vmatprep.subr.mxu0 0.0
    %2047 = vmatpush1.msra.mxu0 0.0
    %2048 = vmatprep.subr.mxu0 0.0
    %2049 = vmatpush1.msra.mxu0 0.0
    %2050 = vmatprep.subr.mxu0 0.0
    %2051 = vmatpush1.msra.mxu0 0.0
    %2052 = vmatprep.subr.mxu0 0.0
    %2053 = vmatpush1.msra.mxu0 0.0
    %2054 = vmatprep.subr.mxu0 0.0
    %2055 = vmatpush1.msra.mxu0 0.0
    %2056 = vmatprep.subr.mxu0 0.0
    %2057 = vmatpush1.msra.mxu0 0.0
    %2058 = vmatprep.subr.mxu0 0.0
    %2059 = vmatpush1.msra.mxu0 0.0
    %2060 = vmatprep.subr.mxu0 0.0
    %2061 = vmatpush1.msra.mxu0 0.0
    %2062 = vmatprep.subr.mxu0 0.0
    %2063 = vmatpush1.msra.mxu0 0.0
    %2064 = vmatprep.subr.mxu0 0.0
    %2065 = vmatpush1.msra.mxu0 0.0
    %2066 = vmatprep.subr.mxu0 0.0
    %2067 = vmatpush1.msra.mxu0 0.0
    %2068 = vmatprep.subr.mxu0 0.0
    %2069 = vmatpush1.msra.mxu0 0.0
    %2070 = vmatprep.subr.mxu0 0.0
    %2071 = vmatpush1.msra.mxu0 0.0
    %2072 = vmatprep.subr.mxu0 0.0
    %2073 = vmatpush1.msra.mxu0 0.0
    %2074 = vmatprep.subr.mxu0 0.0
    %2075 = vmatpush1.msra.mxu0 0.0
    %2076 = vmatprep.subr.mxu0 0.0
    %2077 = vmatpush1.msra.mxu0 0.0
    %2078 = vmatprep.subr.mxu0 0.0
    %2079 = vmatpush1.msra.mxu0 0.0
    %2080 = vmatprep.subr.mxu0 0.0
    %2081 = vmatpush1.msra.mxu0 0.0
    %2082 = vmatprep.subr.mxu0 0.0
    %2083 = vmatpush1.msra.mxu0 0.0
    %2084 = vmatprep.subr.mxu0 0.0
    %2085 = vmatpush1.msra.mxu0 0.0
    %2086 = vmatprep.subr.mxu0 0.0
    %2087 = vmatpush1.msra.mxu0 0.0
    %2088 = vmatprep.subr.mxu0 0.0
    %2089 = vmatpush1.msra.mxu0 0.0
    %2090 = vmatprep.subr.mxu0 0.0
    %2091 = vmatpush1.msra.mxu0 0.0
    %2092 = vmatprep.subr.mxu0 0.0
    %2093 = vmatpush1.msra.mxu0 0.0
    %2094 = vmatprep.subr.mxu0 0.0
    %2095 = vmatpush1.msra.mxu0 0.0
    %2096 = vmatprep.subr.mxu0 0.0
    %2097 = vmatpush1.msra.mxu0 0.0
    %2098 = vmatprep.mubr.f32.mxu0 0.0
    %v2099 = vand.u32 %v1618, 4294901760
    %2100 = vmatmul.mubr.f32.gmra.mrb[0].mxu0 %v2099
    %v2101 = vpop.f32.mrb[0].mxu0
    %v2102 = vadd.f32 %v2027, %v2101
    %v2103 = vpop.f32.mrb[0].mxu0
    %2104 = vdwg.mxu0
    %v2105 = vld [vmem:[#allocation3 + $0xc1] sm:$0x1]
    %v2106 = vlaneseq
    %v2107 = vshrl.u32 %v2106, 7
    %v2108 = vsub.s32 0, %v2107
    %v2109 = vrot.slane %v2105, %v2108
    %v2110 = vadd.f32 %v2102, %v2109
    %v2111 = vxor.u32 %v2110, 2147483648
    %v2112 = vmul.f32 %v2111, 1.442695
    %v2113 = vpow.pop %v2112
    %v2114 = vadd.f32 %v2113, 1.0
    %v2115 = vrcp.pop %v2114
    %v2116 = vmul.f32 1.0, %v2115
    %v2117 = vtanh.pop %v2110
    %v2119 = vmul.f32 %v2116, %v1127
    %2121 = vrot.lane.b32.xlu0 %v2117, 32
    %v2122 = vpop.permute.xlu0 %2121
    %v2124 = vmul.f32 %v2116, %v2122
    %2126 = vrot.lane.b32.xlu0 %v2124, 32
    %v2127 = vpop.permute.xlu0 %2126
    %v2129 = vadd.f32 %v2119, %v2127
    %v2130 = vtanh.pop %v2129
    %2132 = vrot.lane.b32.xlu0 %v2130, 32
    %v2133 = vpop.permute.xlu0 %2132
    %v2135 = vmul.f32 %v2116, %v2133
    %2138 = vrot.lane.b32.xlu0 %v2129, 64
    %v2139 = vpop.permute.xlu0 %2138
    %v2141 = vsel %vm58, %v1617, %v1111
    %v2142 = vsel %vm547, %v2141, %v2135
    %vm2143 = vcmask 785408
    %v2144 = vsel %vm2143, %v2142, %v2139
    %2145 = vst [vmem:[#allocation2] sm:$0xff] %v2144
    %v2146 = vld [vmem:[#allocation3 + $0xa0] sm:$0xff]
    %v2147 = vld [vmem:[#allocation3 + $0xa8] sm:$0xff]
    %v2148 = vld [vmem:[#allocation3 + $0xb0] sm:$0xff]
    %v2149 = vld [vmem:[#allocation3 + $0xb8] sm:$0xff]
    %v2150 = vld [vmem:[#allocation3 + $0xc2] sm:$0x1]
    %v2151 = vlaneseq
    %v2152 = vshrl.u32 %v2151, 7
    %v2153 = vsub.s32 0, %v2152
    %v2154 = vrot.slane %v2150, %v2153
    %2156 = vrot.lane.b32.xlu0 %v2135, 64
    %v2157 = vpop.permute.xlu0 %2156
    %v2158 = vsel %vm58, %v2157, 0
    %2160 = vmatprep.subr.mxu0 0.0
    %v2161 = vand.u32 %v2146, 4294901760
    %2162 = vmatpush1.msra.mxu0 %v2161
    %2163 = vmatprep.subr.mxu0 0.0
    %v2164 = vand.u32 %v2147, 4294901760
    %2165 = vmatpush1.msra.mxu0 %v2164
    %2166 = vmatprep.subr.mxu0 0.0
    %v2167 = vand.u32 %v2148, 4294901760
    %2168 = vmatpush1.msra.mxu0 %v2167
    %2169 = vmatprep.subr.mxu0 0.0
    %v2170 = vand.u32 %v2149, 4294901760
    %2171 = vmatpush1.msra.mxu0 %v2170
    %2172 = vmatprep.subr.mxu0 0.0
    %2173 = vmatpush1.msra.mxu0 0.0
    %2174 = vmatprep.subr.mxu0 0.0
    %2175 = vmatpush1.msra.mxu0 0.0
    %2176 = vmatprep.subr.mxu0 0.0
    %2177 = vmatpush1.msra.mxu0 0.0
    %2178 = vmatprep.subr.mxu0 0.0
    %2179 = vmatpush1.msra.mxu0 0.0
    %2180 = vmatprep.subr.mxu0 0.0
    %2181 = vmatpush1.msra.mxu0 0.0
    %2182 = vmatprep.subr.mxu0 0.0
    %2183 = vmatpush1.msra.mxu0 0.0
    %2184 = vmatprep.subr.mxu0 0.0
    %2185 = vmatpush1.msra.mxu0 0.0
    %2186 = vmatprep.subr.mxu0 0.0
    %2187 = vmatpush1.msra.mxu0 0.0
    %2188 = vmatprep.subr.mxu0 0.0
    %2189 = vmatpush1.msra.mxu0 0.0
    %2190 = vmatprep.subr.mxu0 0.0
    %2191 = vmatpush1.msra.mxu0 0.0
    %2192 = vmatprep.subr.mxu0 0.0
    %2193 = vmatpush1.msra.mxu0 0.0
    %2194 = vmatprep.subr.mxu0 0.0
    %2195 = vmatpush1.msra.mxu0 0.0
    %2196 = vmatprep.subr.mxu0 0.0
    %2197 = vmatpush1.msra.mxu0 0.0
    %2198 = vmatprep.subr.mxu0 0.0
    %2199 = vmatpush1.msra.mxu0 0.0
    %2200 = vmatprep.subr.mxu0 0.0
    %2201 = vmatpush1.msra.mxu0 0.0
    %2202 = vmatprep.subr.mxu0 0.0
    %2203 = vmatpush1.msra.mxu0 0.0
    %2204 = vmatprep.subr.mxu0 0.0
    %2205 = vmatpush1.msra.mxu0 0.0
    %2206 = vmatprep.subr.mxu0 0.0
    %2207 = vmatpush1.msra.mxu0 0.0
    %2208 = vmatprep.subr.mxu0 0.0
    %2209 = vmatpush1.msra.mxu0 0.0
    %2210 = vmatprep.subr.mxu0 0.0
    %2211 = vmatpush1.msra.mxu0 0.0
    %2212 = vmatprep.subr.mxu0 0.0
    %2213 = vmatpush1.msra.mxu0 0.0
    %2214 = vmatprep.subr.mxu0 0.0
    %2215 = vmatpush1.msra.mxu0 0.0
    %2216 = vmatprep.subr.mxu0 0.0
    %2217 = vmatpush1.msra.mxu0 0.0
    %2218 = vmatprep.subr.mxu0 0.0
    %2219 = vmatpush1.msra.mxu0 0.0
    %2220 = vmatprep.subr.mxu0 0.0
    %2221 = vmatpush1.msra.mxu0 0.0
    %2222 = vmatprep.subr.mxu0 0.0
    %2223 = vmatpush1.msra.mxu0 0.0
    %2224 = vmatprep.subr.mxu0 0.0
    %2225 = vmatpush1.msra.mxu0 0.0
    %2226 = vmatprep.subr.mxu0 0.0
    %2227 = vmatpush1.msra.mxu0 0.0
    %2228 = vmatprep.mubr.f32.mxu0 0.0
    %v2229 = vand.u32 %v2158, 4294901760
    %v2230 = vsub.f32 %v2158, %v2229
    %v2231 = vand.u32 %v2230, 4294901760
    %v2232 = vsub.f32 %v2230, %v2231
    %v2233 = vand.u32 %v2232, 4294901760
    %2234 = vmatmul.mubr.f32.gmra.mrb[0].mxu0 %v2233
    %v2235 = vpop.f32.mrb[0].mxu0
    %v2236 = vadd.f32 %v2154, %v2235
    %v2237 = vpop.f32.mrb[0].mxu0
    %2238 = vdwg.mxu0
    %2239 = vmatprep.subr.mxu0 0.0
    %v2240 = vand.u32 %v2146, 4294901760
    %v2241 = vsub.f32 %v2146, %v2240
    %v2242 = vand.u32 %v2241, 4294901760
    %v2243 = vsub.f32 %v2241, %v2242
    %v2244 = vand.u32 %v2243, 4294901760
    %2245 = vmatpush1.msra.mxu0 %v2244
    %2246 = vmatprep.subr.mxu0 0.0
    %v2247 = vand.u32 %v2147, 4294901760
    %v2248 = vsub.f32 %v2147, %v2247
    %v2249 = vand.u32 %v2248, 4294901760
    %v2250 = vsub.f32 %v2248, %v2249
    %v2251 = vand.u32 %v2250, 4294901760
    %2252 = vmatpush1.msra.mxu0 %v2251
    %2253 = vmatprep.subr.mxu0 0.0
    %v2254 = vand.u32 %v2148, 4294901760
    %v2255 = vsub.f32 %v2148, %v2254
    %v2256 = vand.u32 %v2255, 4294901760
    %v2257 = vsub.f32 %v2255, %v2256
    %v2258 = vand.u32 %v2257, 4294901760
    %2259 = vmatpush1.msra.mxu0 %v2258
    %2260 = vmatprep.subr.mxu0 0.0
    %v2261 = vand.u32 %v2149, 4294901760
    %v2262 = vsub.f32 %v2149, %v2261
    %v2263 = vand.u32 %v2262, 4294901760
    %v2264 = vsub.f32 %v2262, %v2263
    %v2265 = vand.u32 %v2264, 4294901760
    %2266 = vmatpush1.msra.mxu0 %v2265
    %2267 = vmatprep.subr.mxu0 0.0
    %2268 = vmatpush1.msra.mxu0 0.0
    %2269 = vmatprep.subr.mxu0 0.0
    %2270 = vmatpush1.msra.mxu0 0.0
    %2271 = vmatprep.subr.mxu0 0.0
    %2272 = vmatpush1.msra.mxu0 0.0
    %2273 = vmatprep.subr.mxu0 0.0
    %2274 = vmatpush1.msra.mxu0 0.0
    %2275 = vmatprep.subr.mxu0 0.0
    %2276 = vmatpush1.msra.mxu0 0.0
    %2277 = vmatprep.subr.mxu0 0.0
    %2278 = vmatpush1.msra.mxu0 0.0
    %2279 = vmatprep.subr.mxu0 0.0
    %2280 = vmatpush1.msra.mxu0 0.0
    %2281 = vmatprep.subr.mxu0 0.0
    %2282 = vmatpush1.msra.mxu0 0.0
    %2283 = vmatprep.subr.mxu0 0.0
    %2284 = vmatpush1.msra.mxu0 0.0
    %2285 = vmatprep.subr.mxu0 0.0
    %2286 = vmatpush1.msra.mxu0 0.0
    %2287 = vmatprep.subr.mxu0 0.0
    %2288 = vmatpush1.msra.mxu0 0.0
    %2289 = vmatprep.subr.mxu0 0.0
    %2290 = vmatpush1.msra.mxu0 0.0
    %2291 = vmatprep.subr.mxu0 0.0
    %2292 = vmatpush1.msra.mxu0 0.0
    %2293 = vmatprep.subr.mxu0 0.0
    %2294 = vmatpush1.msra.mxu0 0.0
    %2295 = vmatprep.subr.mxu0 0.0
    %2296 = vmatpush1.msra.mxu0 0.0
    %2297 = vmatprep.subr.mxu0 0.0
    %2298 = vmatpush1.msra.mxu0 0.0
    %2299 = vmatprep.subr.mxu0 0.0
    %2300 = vmatpush1.msra.mxu0 0.0
    %2301 = vmatprep.subr.mxu0 0.0
    %2302 = vmatpush1.msra.mxu0 0.0
    %2303 = vmatprep.subr.mxu0 0.0
    %2304 = vmatpush1.msra.mxu0 0.0
    %2305 = vmatprep.subr.mxu0 0.0
    %2306 = vmatpush1.msra.mxu0 0.0
    %2307 = vmatprep.subr.mxu0 0.0
    %2308 = vmatpush1.msra.mxu0 0.0
    %2309 = vmatprep.subr.mxu0 0.0
    %2310 = vmatpush1.msra.mxu0 0.0
    %2311 = vmatprep.subr.mxu0 0.0
    %2312 = vmatpush1.msra.mxu0 0.0
    %2313 = vmatprep.subr.mxu0 0.0
    %2314 = vmatpush1.msra.mxu0 0.0
    %2315 = vmatprep.subr.mxu0 0.0
    %2316 = vmatpush1.msra.mxu0 0.0
    %2317 = vmatprep.subr.mxu0 0.0
    %2318 = vmatpush1.msra.mxu0 0.0
    %2319 = vmatprep.subr.mxu0 0.0
    %2320 = vmatpush1.msra.mxu0 0.0
    %2321 = vmatprep.subr.mxu0 0.0
    %2322 = vmatpush1.msra.mxu0 0.0
    %2323 = vmatprep.mubr.f32.mxu0 0.0
    %v2324 = vand.u32 %v2158, 4294901760
    %2325 = vmatmul.mubr.f32.gmra.mrb[0].mxu0 %v2324
    %v2326 = vpop.f32.mrb[0].mxu0
    %v2327 = vadd.f32 %v2236, %v2326
    %v2328 = vpop.f32.mrb[0].mxu0
    %2329 = vdwg.mxu0
    %2330 = vmatprep.subr.mxu0 0.0
    %v2331 = vand.u32 %v2146, 4294901760
    %v2332 = vsub.f32 %v2146, %v2331
    %2333 = vmatpush1.msra.mxu0 %v2332
    %2334 = vmatprep.subr.mxu0 0.0
    %v2335 = vand.u32 %v2147, 4294901760
    %v2336 = vsub.f32 %v2147, %v2335
    %2337 = vmatpush1.msra.mxu0 %v2336
    %2338 = vmatprep.subr.mxu0 0.0
    %v2339 = vand.u32 %v2148, 4294901760
    %v2340 = vsub.f32 %v2148, %v2339
    %2341 = vmatpush1.msra.mxu0 %v2340
    %2342 = vmatprep.subr.mxu0 0.0
    %v2343 = vand.u32 %v2149, 4294901760
    %v2344 = vsub.f32 %v2149, %v2343
    %2345 = vmatpush1.msra.mxu0 %v2344
    %2346 = vmatprep.subr.mxu0 0.0
    %2347 = vmatpush1.msra.mxu0 0.0
    %2348 = vmatprep.subr.mxu0 0.0
    %2349 = vmatpush1.msra.mxu0 0.0
    %2350 = vmatprep.subr.mxu0 0.0
    %2351 = vmatpush1.msra.mxu0 0.0
    %2352 = vmatprep.subr.mxu0 0.0
    %2353 = vmatpush1.msra.mxu0 0.0
    %2354 = vmatprep.subr.mxu0 0.0
    %2355 = vmatpush1.msra.mxu0 0.0
    %2356 = vmatprep.subr.mxu0 0.0
    %2357 = vmatpush1.msra.mxu0 0.0
    %2358 = vmatprep.subr.mxu0 0.0
    %2359 = vmatpush1.msra.mxu0 0.0
    %2360 = vmatprep.subr.mxu0 0.0
    %2361 = vmatpush1.msra.mxu0 0.0
    %2362 = vmatprep.subr.mxu0 0.0
    %2363 = vmatpush1.msra.mxu0 0.0
    %2364 = vmatprep.subr.mxu0 0.0
    %2365 = vmatpush1.msra.mxu0 0.0
    %2366 = vmatprep.subr.mxu0 0.0
    %2367 = vmatpush1.msra.mxu0 0.0
    %2368 = vmatprep.subr.mxu0 0.0
    %2369 = vmatpush1.msra.mxu0 0.0
    %2370 = vmatprep.subr.mxu0 0.0
    %2371 = vmatpush1.msra.mxu0 0.0
    %2372 = vmatprep.subr.mxu0 0.0
    %2373 = vmatpush1.msra.mxu0 0.0
    %2374 = vmatprep.subr.mxu0 0.0
    %2375 = vmatpush1.msra.mxu0 0.0
    %2376 = vmatprep.subr.mxu0 0.0
    %2377 = vmatpush1.msra.mxu0 0.0
    %2378 = vmatprep.subr.mxu0 0.0
    %2379 = vmatpush1.msra.mxu0 0.0
    %2380 = vmatprep.subr.mxu0 0.0
    %2381 = vmatpush1.msra.mxu0 0.0
    %2382 = vmatprep.subr.mxu0 0.0
    %2383 = vmatpush1.msra.mxu0 0.0
    %2384 = vmatprep.subr.mxu0 0.0
    %2385 = vmatpush1.msra.mxu0 0.0
    %2386 = vmatprep.subr.mxu0 0.0
    %2387 = vmatpush1.msra.mxu0 0.0
    %2388 = vmatprep.subr.mxu0 0.0
    %2389 = vmatpush1.msra.mxu0 0.0
    %2390 = vmatprep.subr.mxu0 0.0
    %2391 = vmatpush1.msra.mxu0 0.0
    %2392 = vmatprep.subr.mxu0 0.0
    %2393 = vmatpush1.msra.mxu0 0.0
    %2394 = vmatprep.subr.mxu0 0.0
    %2395 = vmatpush1.msra.mxu0 0.0
    %2396 = vmatprep.subr.mxu0 0.0
    %2397 = vmatpush1.msra.mxu0 0.0
    %2398 = vmatprep.subr.mxu0 0.0
    %2399 = vmatpush1.msra.mxu0 0.0
    %2400 = vmatprep.subr.mxu0 0.0
    %2401 = vmatpush1.msra.mxu0 0.0
    %2402 = vmatprep.mubr.f32.mxu0 0.0
    %v2403 = vand.u32 %v2158, 4294901760
    %v2404 = vsub.f32 %v2158, %v2403
    %2405 = vmatmul.mubr.f32.gmra.mrb[0].mxu0 %v2404
    %v2406 = vpop.f32.mrb[0].mxu0
    %v2407 = vadd.f32 %v2327, %v2406
    %v2408 = vpop.f32.mrb[0].mxu0
    %2409 = vdwg.mxu0
    %2410 = vmatprep.subr.mxu0 0.0
    %v2411 = vand.u32 %v2146, 4294901760
    %2412 = vmatpush1.msra.mxu0 %v2411
    %2413 = vmatprep.subr.mxu0 0.0
    %v2414 = vand.u32 %v2147, 4294901760
    %2415 = vmatpush1.msra.mxu0 %v2414
    %2416 = vmatprep.subr.mxu0 0.0
    %v2417 = vand.u32 %v2148, 4294901760
    %2418 = vmatpush1.msra.mxu0 %v2417
    %2419 = vmatprep.subr.mxu0 0.0
    %v2420 = vand.u32 %v2149, 4294901760
    %2421 = vmatpush1.msra.mxu0 %v2420
    %2422 = vmatprep.subr.mxu0 0.0
    %2423 = vmatpush1.msra.mxu0 0.0
    %2424 = vmatprep.subr.mxu0 0.0
    %2425 = vmatpush1.msra.mxu0 0.0
    %2426 = vmatprep.subr.mxu0 0.0
    %2427 = vmatpush1.msra.mxu0 0.0
    %2428 = vmatprep.subr.mxu0 0.0
    %2429 = vmatpush1.msra.mxu0 0.0
    %2430 = vmatprep.subr.mxu0 0.0
    %2431 = vmatpush1.msra.mxu0 0.0
    %2432 = vmatprep.subr.mxu0 0.0
    %2433 = vmatpush1.msra.mxu0 0.0
    %2434 = vmatprep.subr.mxu0 0.0
    %2435 = vmatpush1.msra.mxu0 0.0
    %2436 = vmatprep.subr.mxu0 0.0
    %2437 = vmatpush1.msra.mxu0 0.0
    %2438 = vmatprep.subr.mxu0 0.0
    %2439 = vmatpush1.msra.mxu0 0.0
    %2440 = vmatprep.subr.mxu0 0.0
    %2441 = vmatpush1.msra.mxu0 0.0
    %2442 = vmatprep.subr.mxu0 0.0
    %2443 = vmatpush1.msra.mxu0 0.0
    %2444 = vmatprep.subr.mxu0 0.0
    %2445 = vmatpush1.msra.mxu0 0.0
    %2446 = vmatprep.subr.mxu0 0.0
    %2447 = vmatpush1.msra.mxu0 0.0
    %2448 = vmatprep.subr.mxu0 0.0
    %2449 = vmatpush1.msra.mxu0 0.0
    %2450 = vmatprep.subr.mxu0 0.0
    %2451 = vmatpush1.msra.mxu0 0.0
    %2452 = vmatprep.subr.mxu0 0.0
    %2453 = vmatpush1.msra.mxu0 0.0
    %2454 = vmatprep.subr.mxu0 0.0
    %2455 = vmatpush1.msra.mxu0 0.0
    %2456 = vmatprep.subr.mxu0 0.0
    %2457 = vmatpush1.msra.mxu0 0.0
    %2458 = vmatprep.subr.mxu0 0.0
    %2459 = vmatpush1.msra.mxu0 0.0
    %2460 = vmatprep.subr.mxu0 0.0
    %2461 = vmatpush1.msra.mxu0 0.0
    %2462 = vmatprep.subr.mxu0 0.0
    %2463 = vmatpush1.msra.mxu0 0.0
    %2464 = vmatprep.subr.mxu0 0.0
    %2465 = vmatpush1.msra.mxu0 0.0
    %2466 = vmatprep.subr.mxu0 0.0
    %2467 = vmatpush1.msra.mxu0 0.0
    %2468 = vmatprep.subr.mxu0 0.0
    %2469 = vmatpush1.msra.mxu0 0.0
    %2470 = vmatprep.subr.mxu0 0.0
    %2471 = vmatpush1.msra.mxu0 0.0
    %2472 = vmatprep.subr.mxu0 0.0
    %2473 = vmatpush1.msra.mxu0 0.0
    %2474 = vmatprep.subr.mxu0 0.0
    %2475 = vmatpush1.msra.mxu0 0.0
    %2476 = vmatprep.subr.mxu0 0.0
    %2477 = vmatpush1.msra.mxu0 0.0
    %2478 = vmatprep.mubr.f32.mxu0 0.0
    %v2479 = vand.u32 %v2158, 4294901760
    %v2480 = vsub.f32 %v2158, %v2479
    %v2481 = vand.u32 %v2480, 4294901760
    %2482 = vmatmul.mubr.f32.gmra.mrb[0].mxu0 %v2481
    %v2483 = vpop.f32.mrb[0].mxu0
    %v2484 = vadd.f32 %v2407, %v2483
    %v2485 = vpop.f32.mrb[0].mxu0
    %2486 = vdwg.mxu0
    %2487 = vmatprep.subr.mxu0 0.0
    %v2488 = vand.u32 %v2146, 4294901760
    %v2489 = vsub.f32 %v2146, %v2488
    %v2490 = vand.u32 %v2489, 4294901760
    %2491 = vmatpush1.msra.mxu0 %v2490
    %2492 = vmatprep.subr.mxu0 0.0
    %v2493 = vand.u32 %v2147, 4294901760
    %v2494 = vsub.f32 %v2147, %v2493
    %v2495 = vand.u32 %v2494, 4294901760
    %2496 = vmatpush1.msra.mxu0 %v2495
    %2497 = vmatprep.subr.mxu0 0.0
    %v2498 = vand.u32 %v2148, 4294901760
    %v2499 = vsub.f32 %v2148, %v2498
    %v2500 = vand.u32 %v2499, 4294901760
    %2501 = vmatpush1.msra.mxu0 %v2500
    %2502 = vmatprep.subr.mxu0 0.0
    %v2503 = vand.u32 %v2149, 4294901760
    %v2504 = vsub.f32 %v2149, %v2503
    %v2505 = vand.u32 %v2504, 4294901760
    %2506 = vmatpush1.msra.mxu0 %v2505
    %2507 = vmatprep.subr.mxu0 0.0
    %2508 = vmatpush1.msra.mxu0 0.0
    %2509 = vmatprep.subr.mxu0 0.0
    %2510 = vmatpush1.msra.mxu0 0.0
    %2511 = vmatprep.subr.mxu0 0.0
    %2512 = vmatpush1.msra.mxu0 0.0
    %2513 = vmatprep.subr.mxu0 0.0
    %2514 = vmatpush1.msra.mxu0 0.0
    %2515 = vmatprep.subr.mxu0 0.0
    %2516 = vmatpush1.msra.mxu0 0.0
    %2517 = vmatprep.subr.mxu0 0.0
    %2518 = vmatpush1.msra.mxu0 0.0
    %2519 = vmatprep.subr.mxu0 0.0
    %2520 = vmatpush1.msra.mxu0 0.0
    %2521 = vmatprep.subr.mxu0 0.0
    %2522 = vmatpush1.msra.mxu0 0.0
    %2523 = vmatprep.subr.mxu0 0.0
    %2524 = vmatpush1.msra.mxu0 0.0
    %2525 = vmatprep.subr.mxu0 0.0
    %2526 = vmatpush1.msra.mxu0 0.0
    %2527 = vmatprep.subr.mxu0 0.0
    %2528 = vmatpush1.msra.mxu0 0.0
    %2529 = vmatprep.subr.mxu0 0.0
    %2530 = vmatpush1.msra.mxu0 0.0
    %2531 = vmatprep.subr.mxu0 0.0
    %2532 = vmatpush1.msra.mxu0 0.0
    %2533 = vmatprep.subr.mxu0 0.0
    %2534 = vmatpush1.msra.mxu0 0.0
    %2535 = vmatprep.subr.mxu0 0.0
    %2536 = vmatpush1.msra.mxu0 0.0
    %2537 = vmatprep.subr.mxu0 0.0
    %2538 = vmatpush1.msra.mxu0 0.0
    %2539 = vmatprep.subr.mxu0 0.0
    %2540 = vmatpush1.msra.mxu0 0.0
    %2541 = vmatprep.subr.mxu0 0.0
    %2542 = vmatpush1.msra.mxu0 0.0
    %2543 = vmatprep.subr.mxu0 0.0
    %2544 = vmatpush1.msra.mxu0 0.0
    %2545 = vmatprep.subr.mxu0 0.0
    %2546 = vmatpush1.msra.mxu0 0.0
    %2547 = vmatprep.subr.mxu0 0.0
    %2548 = vmatpush1.msra.mxu0 0.0
    %2549 = vmatprep.subr.mxu0 0.0
    %2550 = vmatpush1.msra.mxu0 0.0
    %2551 = vmatprep.subr.mxu0 0.0
    %2552 = vmatpush1.msra.mxu0 0.0
    %2553 = vmatprep.subr.mxu0 0.0
    %2554 = vmatpush1.msra.mxu0 0.0
    %2555 = vmatprep.subr.mxu0 0.0
    %2556 = vmatpush1.msra.mxu0 0.0
    %2557 = vmatprep.subr.mxu0 0.0
    %2558 = vmatpush1.msra.mxu0 0.0
    %2559 = vmatprep.subr.mxu0 0.0
    %2560 = vmatpush1.msra.mxu0 0.0
    %2561 = vmatprep.subr.mxu0 0.0
    %2562 = vmatpush1.msra.mxu0 0.0
    %2563 = vmatprep.mubr.f32.mxu0 0.0
    %v2564 = vand.u32 %v2158, 4294901760
    %2565 = vmatmul.mubr.f32.gmra.mrb[0].mxu0 %v2564
    %v2566 = vpop.f32.mrb[0].mxu0
    %v2567 = vadd.f32 %v2484, %v2566
    %v2568 = vpop.f32.mrb[0].mxu0
    %2569 = vdwg.mxu0
    %2570 = vmatprep.subr.mxu0 0.0
    %v2571 = vand.u32 %v2146, 4294901760
    %2572 = vmatpush1.msra.mxu0 %v2571
    %2573 = vmatprep.subr.mxu0 0.0
    %v2574 = vand.u32 %v2147, 4294901760
    %2575 = vmatpush1.msra.mxu0 %v2574
    %2576 = vmatprep.subr.mxu0 0.0
    %v2577 = vand.u32 %v2148, 4294901760
    %2578 = vmatpush1.msra.mxu0 %v2577
    %2579 = vmatprep.subr.mxu0 0.0
    %v2580 = vand.u32 %v2149, 4294901760
    %2581 = vmatpush1.msra.mxu0 %v2580
    %2582 = vmatprep.subr.mxu0 0.0
    %2583 = vmatpush1.msra.mxu0 0.0
    %2584 = vmatprep.subr.mxu0 0.0
    %2585 = vmatpush1.msra.mxu0 0.0
    %2586 = vmatprep.subr.mxu0 0.0
    %2587 = vmatpush1.msra.mxu0 0.0
    %2588 = vmatprep.subr.mxu0 0.0
    %2589 = vmatpush1.msra.mxu0 0.0
    %2590 = vmatprep.subr.mxu0 0.0
    %2591 = vmatpush1.msra.mxu0 0.0
    %2592 = vmatprep.subr.mxu0 0.0
    %2593 = vmatpush1.msra.mxu0 0.0
    %2594 = vmatprep.subr.mxu0 0.0
    %2595 = vmatpush1.msra.mxu0 0.0
    %2596 = vmatprep.subr.mxu0 0.0
    %2597 = vmatpush1.msra.mxu0 0.0
    %2598 = vmatprep.subr.mxu0 0.0
    %2599 = vmatpush1.msra.mxu0 0.0
    %2600 = vmatprep.subr.mxu0 0.0
    %2601 = vmatpush1.msra.mxu0 0.0
    %2602 = vmatprep.subr.mxu0 0.0
    %2603 = vmatpush1.msra.mxu0 0.0
    %2604 = vmatprep.subr.mxu0 0.0
    %2605 = vmatpush1.msra.mxu0 0.0
    %2606 = vmatprep.subr.mxu0 0.0
    %2607 = vmatpush1.msra.mxu0 0.0
    %2608 = vmatprep.subr.mxu0 0.0
    %2609 = vmatpush1.msra.mxu0 0.0
    %2610 = vmatprep.subr.mxu0 0.0
    %2611 = vmatpush1.msra.mxu0 0.0
    %2612 = vmatprep.subr.mxu0 0.0
    %2613 = vmatpush1.msra.mxu0 0.0
    %2614 = vmatprep.subr.mxu0 0.0
    %2615 = vmatpush1.msra.mxu0 0.0
    %2616 = vmatprep.subr.mxu0 0.0
    %2617 = vmatpush1.msra.mxu0 0.0
    %2618 = vmatprep.subr.mxu0 0.0
    %2619 = vmatpush1.msra.mxu0 0.0
    %2620 = vmatprep.subr.mxu0 0.0
    %2621 = vmatpush1.msra.mxu0 0.0
    %2622 = vmatprep.subr.mxu0 0.0
    %2623 = vmatpush1.msra.mxu0 0.0
    %2624 = vmatprep.subr.mxu0 0.0
    %2625 = vmatpush1.msra.mxu0 0.0
    %2626 = vmatprep.subr.mxu0 0.0
    %2627 = vmatpush1.msra.mxu0 0.0
    %2628 = vmatprep.subr.mxu0 0.0
    %2629 = vmatpush1.msra.mxu0 0.0
    %2630 = vmatprep.subr.mxu0 0.0
    %2631 = vmatpush1.msra.mxu0 0.0
    %2632 = vmatprep.subr.mxu0 0.0
    %2633 = vmatpush1.msra.mxu0 0.0
    %2634 = vmatprep.subr.mxu0 0.0
    %2635 = vmatpush1.msra.mxu0 0.0
    %2636 = vmatprep.subr.mxu0 0.0
    %2637 = vmatpush1.msra.mxu0 0.0
    %2638 = vmatprep.mubr.f32.mxu0 0.0
    %v2639 = vand.u32 %v2158, 4294901760
    %2640 = vmatmul.mubr.f32.gmra.mrb[0].mxu0 %v2639
    %v2641 = vpop.f32.mrb[0].mxu0
    %v2642 = vadd.f32 %v2567, %v2641
    %v2643 = vpop.f32.mrb[0].mxu0
    %2644 = vdwg.mxu0
    %2645 = vst [vmem:[%s3] sm:$0xff] %v2642
    // Predicated region
    $region22: #{decoder_lstm_forward.1} parent=1 // pred_check
      %p2646 = pneg %p30
    $region23: #{decoder_lstm_forward.1} parent=1 // pred_check_branch
      %2648 = sbr.rel (%p2646) target = $region25
    $region24: #{decoder_lstm_forward.1} parent=1 // pred_region
      %2649 = vst [vmem:[%s4] sm:$0xff] %v2144
    $region25: #{decoder_lstm_forward.1} parent=1 // pred_fallthru
      _
    // Predicated region
    $region26: #{decoder_lstm_forward.1} parent=1 // pred_check
      _
    $region27: #{decoder_lstm_forward.1} parent=1 // pred_check_branch
      %2651 = sbr.rel (0) target = $region29
    $region28: #{decoder_lstm_forward.1} parent=1 // pred_region
      _
    $region29: #{decoder_lstm_forward.1} parent=1 // pred_fallthru
      _
    // Predicated region
    $region30: #{decoder_lstm_forward.1} parent=1 // pred_check
      _
    $region31: #{decoder_lstm_forward.1} parent=1 // pred_check_branch
      %2653 = sbr.rel (0) target = $region33
    $region32: #{decoder_lstm_forward.1} parent=1 // pred_region
      _
    $region33: #{decoder_lstm_forward.1} parent=1 // pred_fallthru
      _
    // Predicated region
    $region34: #{decoder_lstm_forward.1} parent=1 // pred_check
      _
    $region35: #{decoder_lstm_forward.1} parent=1 // pred_check_branch
      %2655 = sbr.rel (0) target = $region37
    $region36: #{decoder_lstm_forward.1} parent=1 // pred_region
      _
    $region37: #{decoder_lstm_forward.1} parent=1 // pred_fallthru
      _
    // Predicated region
    $region38: #{decoder_lstm_forward.1} parent=1 // pred_check
      _
    $region39: #{decoder_lstm_forward.1} parent=1 // pred_check_branch
      %2657 = sbr.rel (0) target = $region41
    $region40: #{decoder_lstm_forward.1} parent=1 // pred_region
      _
    $region41: #{decoder_lstm_forward.1} parent=1 // pred_fallthru
      _
    %2658 = vsyncpa [#allocation4], 1

</llo_original>
